<compile_context>
chip_gen: v7x
topology: tpu7x:2x2x1
jax: 0.10.0
libtpu: 0.0.40
codegen_flags: <defaults>
</compile_context>

<pallas_src>
import jax
import jax.numpy as jnp
from jax.experimental import pallas as pl
from jax.experimental.pallas import tpu as pltpu


def _round_up(x, m):
    return (x + m - 1) // m * m


# ----------------------------- Pallas kernel --------------------------------
def _simclr_fused_kernel(spec_ref, mfcc_ref, small_ref,
                         w_spec_ref, w_mfcc_ref, w_small_ref, b1_ref,
                         w2_ref, b2_ref, out_ref):
    f32 = jnp.float32
    # Folded (mean-pool -> fusion linear -> head layer 1): bf16 operands on
    # the MXU for the big streams, f32 accumulation, f32 bias epilogue.
    h = (jnp.dot(spec_ref[...], w_spec_ref[...], preferred_element_type=f32)
         + jnp.dot(mfcc_ref[...], w_mfcc_ref[...], preferred_element_type=f32)
         + jnp.dot(small_ref[...], w_small_ref[...], preferred_element_type=f32)
         + b1_ref[...])                                      # (TB, 256)
    h = jnp.maximum(h, 0.0)                                  # ReLU
    proj = jnp.dot(h.astype(jnp.bfloat16), w2_ref[...],
                   preferred_element_type=f32) + b2_ref[...]  # (TB, 128)
    out_ref[...] = proj.astype(out_ref.dtype)


# ----------------------------- wrapper ---------------------------------------
def simclr_forward(params, spectrogram, mfcc, articulatory, input_ids,
                   attention_mask, *, tile_b_max=1024):
    """Fused encoder-stub + projection-head forward, batch-tiled Pallas call."""
    B, c_spec, hs, ws = spectrogram.shape
    _, c_mfcc, hm, wm = mfcc.shape
    hw_s, hw_m = hs * ws, hm * wm
    a_dim = articulatory.shape[1]
    emb_dim = params["emb"].shape[1]
    hidden = params["w1"].shape[1]                 # 256
    proj_dim = params["w2"].shape[1]               # 128
    small_dim = a_dim + emb_dim
    f32, bf16 = jnp.float32, jnp.bfloat16

    # ---- XLA-side prep (cheap; removes wasteful kernel streams) -------------
    # TODO(synk): a fully in-kernel embedding gather would need a manual
    # scalar-prefetch-driven DMA gather; a pooled masked mean does not need it.
    tok = params["emb"][input_ids].astype(f32)                   # (B, T, E)
    mask = attention_mask.astype(f32)[..., None]                 # (B, T, 1)
    txt = (tok * mask).sum(axis=1) / jnp.maximum(mask.sum(axis=1), 1.0)
    small = jnp.concatenate([articulatory.astype(f32), txt], axis=-1)  # (B, A+E)

    # Big modality streams: 2-D, bf16 (half the DMA bytes, no sublane padding).
    spec2d = spectrogram.reshape(B, c_spec * hw_s).astype(bf16)
    mfcc2d = mfcc.reshape(B, c_mfcc * hw_m).astype(bf16)

    # Fold mean-pool + fusion Linear(D_fuse,384) + head Linear(384,256):
    #   W1' = We @ W1, with the 1/HW spatial mean folded by Kronecker-expanding
    #   each channel row HW times.   b1' = be @ W1 + b1.
    we = params["we"].astype(f32)                                # (D_fuse, 384)
    w1 = params["w1"].astype(f32)                                # (384, 256)
    we_w1 = we @ w1                                              # (D_fuse, 256)
    w_spec = (jnp.repeat(we_w1[:c_spec], hw_s, axis=0)
              * (1.0 / hw_s)).astype(bf16)                       # (c_spec*HW, 256)
    w_mfcc = (jnp.repeat(we_w1[c_spec:c_spec + c_mfcc], hw_m, axis=0)
              * (1.0 / hw_m)).astype(bf16)                       # (c_mfcc*HW, 256)
    w_small = we_w1[c_spec + c_mfcc:]                            # (A+E, 256) f32
    b1p = params["be"].astype(f32) @ w1 + params["b1"].astype(f32)  # (1, 256)
    w2 = params["w2"].astype(bf16)                               # (256, 128)
    b2 = params["b2"].astype(f32)                                # (1, 128)

    # ---- per-generation tile sizing against the scoped VMEM limit -----------
    try:
        vmem_phys = int(pltpu.get_tpu_info().vmem_capacity_bytes)
    except Exception:
        vmem_phys = 64 << 20            # conservative: v7x per-TensorCore VMEM
    vmem_limit = min(int(vmem_phys * 0.70), 96 << 20)

    def _padded_row(lane, itemsize):    # lane dim pads to a multiple of 128
        return _round_up(lane, 128) * itemsize

    act_row = (_padded_row(c_spec * hw_s, 2) + _padded_row(c_mfcc * hw_m, 2)
               + _padded_row(small_dim, 4) + _padded_row(proj_dim, 4))
    resident = 2 * (w_spec.size * 2 + w_mfcc.size * 2 + w_small.size * 4
                    + b1p.size * 4 + w2.size * 2 + b2.size * 4)
    budget = int(vmem_limit * 0.85) - resident
    tb = max(8, budget // (2 * act_row))            # 2 = double-buffering
    tb = min(tile_b_max, tb)
    if B >= 16:
        # keep >=2 grid steps so the 'parallel' batch axis can feed both
        # TensorCores on megacore parts
        tb = min(tb, _round_up(pl.cdiv(B, 2), 8))
    tb = (tb // 8) * 8
    tb = max(1, min(tb, B))
    grid = (pl.cdiv(B, tb),)

    row = lambda i: (i, 0)
    pin = lambda i: (0, 0)              # weights pinned in VMEM across steps
    in_specs = [
        pl.BlockSpec((tb, c_spec * hw_s), row),
        pl.BlockSpec((tb, c_mfcc * hw_m), row),
        pl.BlockSpec((tb, small_dim), row),
        pl.BlockSpec((c_spec * hw_s, hidden), pin),
        pl.BlockSpec((c_mfcc * hw_m, hidden), pin),
        pl.BlockSpec((small_dim, hidden), pin),
        pl.BlockSpec((1, hidden), pin),
        pl.BlockSpec((hidden, proj_dim), pin),
        pl.BlockSpec((1, proj_dim), pin),
    ]
    out_specs = pl.BlockSpec((tb, proj_dim), row)   # lane-dense (128) stores

    operands = (spec2d, mfcc2d, small, w_spec, w_mfcc, w_small, b1p, w2, b2)
    flops = 2 * B * ((c_spec * hw_s + c_mfcc * hw_m + small_dim) * hidden
                     + hidden * proj_dim)
    bytes_accessed = int(sum(x.size * x.dtype.itemsize for x in operands)
                         + B * proj_dim * 4)
    cost = pl.CostEstimate(flops=flops, transcendentals=0,
                           bytes_accessed=bytes_accessed)

    return pl.pallas_call(
        _simclr_fused_kernel,
        out_shape=jax.ShapeDtypeStruct((B, proj_dim), jnp.float32),
        grid=grid,
        in_specs=in_specs,
        out_specs=out_specs,
        compiler_params=pltpu.CompilerParams(
            dimension_semantics=("parallel",),
            vmem_limit_bytes=vmem_limit),
        cost_estimate=cost,
    )(*operands)


# ----------------------------- reference glue --------------------------------
def encoder_pool(spectrogram, mfcc, articulatory, input_ids, attention_mask,
                 emb_table):
    """Pure-JAX version of the deterministic multimodal pooling stub."""
    spec_pool = spectrogram.mean(axis=(2, 3))                   # (B, C_spec)
    mfcc_pool = mfcc.mean(axis=(2, 3))                          # (B, C_mfcc)
    tok = emb_table[input_ids]                                  # (B, T, E)
    mask = attention_mask.astype(jnp.float32)[..., None]        # (B, T, 1)
    txt = (tok * mask).sum(axis=1) / jnp.maximum(mask.sum(axis=1), 1.0)
    return jnp.concatenate(
        [spec_pool, mfcc_pool, articulatory.astype(jnp.float32), txt],
        axis=-1)                                                # (B, D_fuse)


# ----------------------------- param init ------------------------------------
def _linear_init(key, fan_in, fan_out):
    """PyTorch nn.Linear default: U(-1/sqrt(fan_in), 1/sqrt(fan_in))."""
    kw, kb = jax.random.split(key)
    bound = 1.0 / jnp.sqrt(float(fan_in))
    w = jax.random.uniform(kw, (fan_in, fan_out), jnp.float32, -bound, bound)
    b = jax.random.uniform(kb, (1, fan_out), jnp.float32, -bound, bound)
    return w, b


def init_params(key, d_fuse, vocab, emb_dim, projection_dim=128):
    k_emb, k_enc, k_l1, k_l2 = jax.random.split(key, 4)
    emb = jax.random.normal(k_emb, (vocab, emb_dim), jnp.float32) * 0.02
    we, be = _linear_init(k_enc, d_fuse, 384)           # encoder fusion -> 384
    w1, b1 = _linear_init(k_l1, 384, 256)               # Linear(384, 256)
    w2, b2 = _linear_init(k_l2, 256, projection_dim)    # Linear(256, 128)
    return dict(emb=emb, we=we, be=be, w1=w1, b1=b1, w2=w2, b2=b2)


# --------------------------------- main ---------------------------------------
if __name__ == "__main__":
    B, C_SPEC, C_MFCC, HW = 2, 4, 4, 16
    ART_DIM, SEQ, VOCAB, EMB = 16, 8, 32, 8
    D_FUSE = C_SPEC + C_MFCC + ART_DIM + EMB        # 4 + 4 + 16 + 8 = 32

    root = jax.random.PRNGKey(0)
    k_params, k_spec, k_mfcc, k_art, k_ids = jax.random.split(root, 5)

    params = init_params(k_params, D_FUSE, VOCAB, EMB, projection_dim=128)

    spectrogram = jax.random.normal(k_spec, (B, C_SPEC, HW, HW), jnp.float32)
    mfcc = jax.random.normal(k_mfcc, (B, C_MFCC, HW, HW), jnp.float32)
    articulatory = jax.random.normal(k_art, (B, ART_DIM), jnp.float32)
    input_ids = jax.random.randint(k_ids, (B, SEQ), 0, VOCAB, jnp.int32)
    attention_mask = jnp.ones((B, SEQ), jnp.int32).at[:, SEQ - 2:].set(0)

    # Pallas forward (jitted so the cost estimate informs XLA scheduling).
    projections = jax.jit(simclr_forward)(params, spectrogram, mfcc,
                                          articulatory, input_ids,
                                          attention_mask)
    projections = jax.block_until_ready(projections)
    assert projections.shape == (B, 128)

    # Pure-JAX f32 reference. The kernel runs the matmuls with bf16 operands
    # (f32 accumulation), hence the relaxed tolerance.
    x_fused = encoder_pool(spectrogram, mfcc, articulatory, input_ids,
                           attention_mask, params["emb"])
    feats_ref = x_fused @ params["we"] + params["be"]
    h_ref = jnp.maximum(feats_ref @ params["w1"] + params["b1"], 0.0)
    proj_ref = h_ref @ params["w2"] + params["b2"]

    assert jnp.allclose(projections, proj_ref, atol=2e-2, rtol=2e-2), (
        "Pallas kernel mismatch vs reference")
    print("KERNEL_OK")
</pallas_src>

<mosaic_0001>
module attributes {stable_mosaic.version = 11 : i64} {
  func.func @_simclr_fused_kernel(%arg0: i32, %arg1: memref<2x1024xbf16, #tpu.memory_space<vmem>>, %arg2: memref<2x1024xbf16, #tpu.memory_space<vmem>>, %arg3: memref<2x24xf32, #tpu.memory_space<vmem>>, %arg4: memref<1024x256xbf16, #tpu.memory_space<vmem>>, %arg5: memref<1024x256xbf16, #tpu.memory_space<vmem>>, %arg6: memref<24x256xf32, #tpu.memory_space<vmem>>, %arg7: memref<1x256xf32, #tpu.memory_space<vmem>>, %arg8: memref<256x128xbf16, #tpu.memory_space<vmem>>, %arg9: memref<1x128xf32, #tpu.memory_space<vmem>>, %arg10: memref<2x128xf32, #tpu.memory_space<vmem>>) attributes {dimension_semantics = [#tpu.dimension_semantics<parallel>], iteration_bounds = array<i64: 1>, scalar_prefetch = 0 : i64, scratch_operands = 0 : i64, tpu.core_type = #tpu.core_type<tc>, window_params = [{transform_indices = @transform_0, window_bounds = array<i64: 2, 1024>}, {transform_indices = @transform_1, window_bounds = array<i64: 2, 1024>}, {transform_indices = @transform_2, window_bounds = array<i64: 2, 24>}, {pipeline_mode = #tpu.pipeline_mode<synchronous>, transform_indices = @transform_3, window_bounds = array<i64: 1024, 256>}, {pipeline_mode = #tpu.pipeline_mode<synchronous>, transform_indices = @transform_4, window_bounds = array<i64: 1024, 256>}, {pipeline_mode = #tpu.pipeline_mode<synchronous>, transform_indices = @transform_5, window_bounds = array<i64: 24, 256>}, {pipeline_mode = #tpu.pipeline_mode<synchronous>, transform_indices = @transform_6, window_bounds = array<i64: 1, 256>}, {pipeline_mode = #tpu.pipeline_mode<synchronous>, transform_indices = @transform_7, window_bounds = array<i64: 256, 128>}, {pipeline_mode = #tpu.pipeline_mode<synchronous>, transform_indices = @transform_8, window_bounds = array<i64: 1, 128>}, {transform_indices = @transform_9, window_bounds = array<i64: 2, 128>}]} {
    %c0 = arith.constant 0 : index
    %c0_0 = arith.constant 0 : index
    %0 = vector.load %arg1[%c0, %c0_0] : memref<2x1024xbf16, #tpu.memory_space<vmem>>, vector<2x1024xbf16>
    %c0_1 = arith.constant 0 : index
    %c0_2 = arith.constant 0 : index
    %1 = vector.load %arg4[%c0_1, %c0_2] : memref<1024x256xbf16, #tpu.memory_space<vmem>>, vector<1024x256xbf16>
    %cst = arith.constant dense<0.000000e+00> : vector<2x256xf32>
    %2 = tpu.matmul %0, %1, %cst {dimension_numbers = #tpu.dot_dimension_numbers<[1], [0], [0], [1], [0, 0, 1, 1], [], []>} : vector<2x1024xbf16>, vector<1024x256xbf16>, vector<2x256xf32> -> vector<2x256xf32>
    %c0_3 = arith.constant 0 : index
    %c0_4 = arith.constant 0 : index
    %3 = vector.load %arg2[%c0_3, %c0_4] : memref<2x1024xbf16, #tpu.memory_space<vmem>>, vector<2x1024xbf16>
    %c0_5 = arith.constant 0 : index
    %c0_6 = arith.constant 0 : index
    %4 = vector.load %arg5[%c0_5, %c0_6] : memref<1024x256xbf16, #tpu.memory_space<vmem>>, vector<1024x256xbf16>
    %cst_7 = arith.constant dense<0.000000e+00> : vector<2x256xf32>
    %5 = tpu.matmul %3, %4, %cst_7 {dimension_numbers = #tpu.dot_dimension_numbers<[1], [0], [0], [1], [0, 0, 1, 1], [], []>} : vector<2x1024xbf16>, vector<1024x256xbf16>, vector<2x256xf32> -> vector<2x256xf32>
    %6 = arith.addf %2, %5 : vector<2x256xf32>
    %c0_8 = arith.constant 0 : index
    %c0_9 = arith.constant 0 : index
    %7 = vector.load %arg3[%c0_8, %c0_9] : memref<2x24xf32, #tpu.memory_space<vmem>>, vector<2x24xf32>
    %c0_10 = arith.constant 0 : index
    %c0_11 = arith.constant 0 : index
    %8 = vector.load %arg6[%c0_10, %c0_11] : memref<24x256xf32, #tpu.memory_space<vmem>>, vector<24x256xf32>
    %cst_12 = arith.constant dense<0.000000e+00> : vector<2x256xf32>
    %9 = tpu.matmul %7, %8, %cst_12 {dimension_numbers = #tpu.dot_dimension_numbers<[1], [0], [0], [1], [0, 0, 1, 1], [], []>} : vector<2x24xf32>, vector<24x256xf32>, vector<2x256xf32> -> vector<2x256xf32>
    %10 = arith.addf %6, %9 : vector<2x256xf32>
    %c0_13 = arith.constant 0 : index
    %c0_14 = arith.constant 0 : index
    %11 = vector.load %arg7[%c0_13, %c0_14] : memref<1x256xf32, #tpu.memory_space<vmem>>, vector<1x256xf32>
    %12 = vector.broadcast %11 : vector<1x256xf32> to vector<2x256xf32>
    %13 = arith.addf %10, %12 : vector<2x256xf32>
    %cst_15 = arith.constant 0.000000e+00 : f32
    %14 = vector.broadcast %cst_15 : f32 to vector<2x256xf32>
    %15 = arith.maximumf %13, %14 : vector<2x256xf32>
    %16 = arith.truncf %15 : vector<2x256xf32> to vector<2x256xbf16>
    %c0_16 = arith.constant 0 : index
    %c0_17 = arith.constant 0 : index
    %17 = vector.load %arg8[%c0_16, %c0_17] : memref<256x128xbf16, #tpu.memory_space<vmem>>, vector<256x128xbf16>
    %cst_18 = arith.constant dense<0.000000e+00> : vector<2x128xf32>
    %18 = tpu.matmul %16, %17, %cst_18 {dimension_numbers = #tpu.dot_dimension_numbers<[1], [0], [0], [1], [0, 0, 1, 1], [], []>} : vector<2x256xbf16>, vector<256x128xbf16>, vector<2x128xf32> -> vector<2x128xf32>
    %c0_19 = arith.constant 0 : index
    %c0_20 = arith.constant 0 : index
    %19 = vector.load %arg9[%c0_19, %c0_20] : memref<1x128xf32, #tpu.memory_space<vmem>>, vector<1x128xf32>
    %20 = vector.broadcast %19 : vector<1x128xf32> to vector<2x128xf32>
    %21 = arith.addf %18, %20 : vector<2x128xf32>
    %c0_21 = arith.constant 0 : index
    %c0_22 = arith.constant 0 : index
    %22 = vector.load %arg10[%c0_21, %c0_22] : memref<2x128xf32, #tpu.memory_space<vmem>>, vector<2x128xf32>
    tpu.vector_store %arg10[%c0_21, %c0_22], %21 {strides = array<i32>} : memref<2x128xf32, #tpu.memory_space<vmem>>, vector<2x128xf32>,
    return
  }
  func.func @transform_0(%arg0: i32) -> (i32, i32) {
    %c0_i32 = arith.constant 0 : i32
    %c0_i32_0 = arith.constant 0 : i32
    return %arg0, %c0_i32 : i32, i32
  }
  func.func @transform_1(%arg0: i32) -> (i32, i32) {
    %c0_i32 = arith.constant 0 : i32
    %c0_i32_0 = arith.constant 0 : i32
    return %arg0, %c0_i32 : i32, i32
  }
  func.func @transform_2(%arg0: i32) -> (i32, i32) {
    %c0_i32 = arith.constant 0 : i32
    %c0_i32_0 = arith.constant 0 : i32
    return %arg0, %c0_i32 : i32, i32
  }
  func.func @transform_3(%arg0: i32) -> (i32, i32) {
    %c0_i32 = arith.constant 0 : i32
    %c0_i32_0 = arith.constant 0 : i32
    %c0_i32_1 = arith.constant 0 : i32
    return %c0_i32, %c0_i32_0 : i32, i32
  }
  func.func @transform_4(%arg0: i32) -> (i32, i32) {
    %c0_i32 = arith.constant 0 : i32
    %c0_i32_0 = arith.constant 0 : i32
    %c0_i32_1 = arith.constant 0 : i32
    return %c0_i32, %c0_i32_0 : i32, i32
  }
  func.func @transform_5(%arg0: i32) -> (i32, i32) {
    %c0_i32 = arith.constant 0 : i32
    %c0_i32_0 = arith.constant 0 : i32
    %c0_i32_1 = arith.constant 0 : i32
    return %c0_i32, %c0_i32_0 : i32, i32
  }
  func.func @transform_6(%arg0: i32) -> (i32, i32) {
    %c0_i32 = arith.constant 0 : i32
    %c0_i32_0 = arith.constant 0 : i32
    %c0_i32_1 = arith.constant 0 : i32
    return %c0_i32, %c0_i32_0 : i32, i32
  }
  func.func @transform_7(%arg0: i32) -> (i32, i32) {
    %c0_i32 = arith.constant 0 : i32
    %c0_i32_0 = arith.constant 0 : i32
    %c0_i32_1 = arith.constant 0 : i32
    return %c0_i32, %c0_i32_0 : i32, i32
  }
  func.func @transform_8(%arg0: i32) -> (i32, i32) {
    %c0_i32 = arith.constant 0 : i32
    %c0_i32_0 = arith.constant 0 : i32
    %c0_i32_1 = arith.constant 0 : i32
    return %c0_i32, %c0_i32_0 : i32, i32
  }
  func.func @transform_9(%arg0: i32) -> (i32, i32) {
    %c0_i32 = arith.constant 0 : i32
    %c0_i32_0 = arith.constant 0 : i32
    return %arg0, %c0_i32 : i32, i32
  }
}

</mosaic_0001>

<llo_original>
// kernel: simclr_forward.1
$region0: #{simclr_forward.1}
  #allocation0 [shape = 'u32[]', space=smem, size = 0x4, offset = 0x4, fixed_abs, tag = 'smem constant byte address 0x4 - core index']
  #allocation1 [shape = 'u32[144,128]{1,0:T(1,128)}', space=vmem, size = 0x12000, scoped, tag = 'internal scratch']
  %s0 = inlined_call_operand.vmem [shape: bf16[2,1024], index: 0, kind: input, shape index: {}]
  %s1 = inlined_call_operand.vmem [shape: bf16[2,1024], index: 1, kind: input, shape index: {}]
  %s2 = inlined_call_operand.vmem [shape: f32[2,24], index: 2, kind: input, shape index: {}]
  %s3 = inlined_call_operand.vmem [shape: bf16[1024,256], index: 3, kind: input, shape index: {}]
  %s4 = inlined_call_operand.vmem [shape: bf16[1024,256], index: 4, kind: input, shape index: {}]
  %s5 = inlined_call_operand.vmem [shape: f32[24,256], index: 5, kind: input, shape index: {}]
  %s6 = inlined_call_operand.vmem [shape: f32[1,256], index: 6, kind: input, shape index: {}]
  %s7 = inlined_call_operand.vmem [shape: bf16[256,128], index: 7, kind: input, shape index: {}]
  %s8 = inlined_call_operand.vmem [shape: f32[1,128], index: 8, kind: input, shape index: {}]
  %s9 = inlined_call_operand.hbm [shape: f32[2,128], index: 9, kind: output, shape index: {}]
  %s10 = sld [smem:[#allocation0]]
  $region46: #{simclr_forward.1} parent=0
    _
  %s12 = ssub.s32 1, %s10
  %s13 = scalar_select 0, %s12, %s10
  $region1: #{simclr_forward.1} parent=0
    #allocation2 [shape = 'u8[1024]{0}', space=vmem, size = 0x400, scoped, tag = 'output window, operand 0, single buffered']
    #allocation3 [shape = 's32[1]{0}', space=sflag, size = 0x4, scoped, tag = 'scoped memory for simclr_forward.1']
    %14 = vsyncpa [#allocation3], 0
    // Predicated region
    $region2: #{simclr_forward.1} parent=1 // pred_check
      _
    $region3: #{simclr_forward.1} parent=1 // pred_check_branch
      %16 = sbr.rel (0) target = $region5
    $region4: #{simclr_forward.1} parent=1 // pred_region
      _
    $region5: #{simclr_forward.1} parent=1 // pred_fallthru
      _
    // Predicated region
    $region6: #{simclr_forward.1} parent=1 // pred_check
      _
    $region7: #{simclr_forward.1} parent=1 // pred_check_branch
      %18 = sbr.rel (0) target = $region9
    $region8: #{simclr_forward.1} parent=1 // pred_region
      _
    $region9: #{simclr_forward.1} parent=1 // pred_fallthru
      _
    // Predicated region
    $region10: #{simclr_forward.1} parent=1 // pred_check
      _
    $region11: #{simclr_forward.1} parent=1 // pred_check_branch
      %20 = sbr.rel (0) target = $region13
    $region12: #{simclr_forward.1} parent=1 // pred_region
      _
    $region13: #{simclr_forward.1} parent=1 // pred_fallthru
      _
    // Predicated region
    $region14: #{simclr_forward.1} parent=1 // pred_check
      _
    $region15: #{simclr_forward.1} parent=1 // pred_check_branch
      %22 = sbr.rel (0) target = $region17
    $region16: #{simclr_forward.1} parent=1 // pred_region
      _
    $region17: #{simclr_forward.1} parent=1 // pred_fallthru
      _
    // Predicated region
    $region18: #{simclr_forward.1} parent=1 // pred_check
      _
    $region19: #{simclr_forward.1} parent=1 // pred_check_branch
      %24 = sbr.rel (0) target = $region21
    $region20: #{simclr_forward.1} parent=1 // pred_region
      _
    $region21: #{simclr_forward.1} parent=1 // pred_fallthru
      _
    // Predicated region
    $region22: #{simclr_forward.1} parent=1 // pred_check
      _
    $region23: #{simclr_forward.1} parent=1 // pred_check_branch
      %26 = sbr.rel (0) target = $region25
    $region24: #{simclr_forward.1} parent=1 // pred_region
      _
    $region25: #{simclr_forward.1} parent=1 // pred_fallthru
      _
    // Predicated region
    $region26: #{simclr_forward.1} parent=1 // pred_check
      _
    $region27: #{simclr_forward.1} parent=1 // pred_check_branch
      %28 = sbr.rel (0) target = $region29
    $region28: #{simclr_forward.1} parent=1 // pred_region
      _
    $region29: #{simclr_forward.1} parent=1 // pred_fallthru
      _
    // Predicated region
    $region30: #{simclr_forward.1} parent=1 // pred_check
      _
    $region31: #{simclr_forward.1} parent=1 // pred_check_branch
      %30 = sbr.rel (0) target = $region33
    $region32: #{simclr_forward.1} parent=1 // pred_region
      _
    $region33: #{simclr_forward.1} parent=1 // pred_fallthru
      _
    // Predicated region
    $region34: #{simclr_forward.1} parent=1 // pred_check
      _
    $region35: #{simclr_forward.1} parent=1 // pred_check_branch
      %32 = sbr.rel (0) target = $region37
    $region36: #{simclr_forward.1} parent=1 // pred_region
      _
    $region37: #{simclr_forward.1} parent=1 // pred_fallthru
      _
    %v34 = vld [vmem:[%s0] sm:$0xff]
    %v35 = vld [vmem:[%s3] sm:$0xff]
    %v36 = vld [vmem:[%s3 + $0x8] sm:$0xff]
    %v37 = vld [vmem:[%s3 + $0x10] sm:$0xff]
    %v38 = vld [vmem:[%s3 + $0x18] sm:$0xff]
    %v39 = vld [vmem:[%s3 + $0x20] sm:$0xff]
    %v40 = vld [vmem:[%s3 + $0x28] sm:$0xff]
    %v41 = vld [vmem:[%s3 + $0x30] sm:$0xff]
    %v42 = vld [vmem:[%s3 + $0x38] sm:$0xff]
    %v43 = vld [vmem:[%s3 + $0x40] sm:$0xff]
    %v44 = vld [vmem:[%s3 + $0x48] sm:$0xff]
    %v45 = vld [vmem:[%s3 + $0x50] sm:$0xff]
    %v46 = vld [vmem:[%s3 + $0x58] sm:$0xff]
    %v47 = vld [vmem:[%s3 + $0x60] sm:$0xff]
    %v48 = vld [vmem:[%s3 + $0x68] sm:$0xff]
    %v49 = vld [vmem:[%s3 + $0x70] sm:$0xff]
    %v50 = vld [vmem:[%s3 + $0x78] sm:$0xff]
    %v51 = vld [vmem:[%s3 + $0x80] sm:$0xff]
    %v52 = vld [vmem:[%s3 + $0x88] sm:$0xff]
    %v53 = vld [vmem:[%s3 + $0x90] sm:$0xff]
    %v54 = vld [vmem:[%s3 + $0x98] sm:$0xff]
    %v55 = vld [vmem:[%s3 + $0xa0] sm:$0xff]
    %v56 = vld [vmem:[%s3 + $0xa8] sm:$0xff]
    %v57 = vld [vmem:[%s3 + $0xb0] sm:$0xff]
    %v58 = vld [vmem:[%s3 + $0xb8] sm:$0xff]
    %v59 = vld [vmem:[%s3 + $0xc0] sm:$0xff]
    %v60 = vld [vmem:[%s3 + $0xc8] sm:$0xff]
    %v61 = vld [vmem:[%s3 + $0xd0] sm:$0xff]
    %v62 = vld [vmem:[%s3 + $0xd8] sm:$0xff]
    %v63 = vld [vmem:[%s3 + $0xe0] sm:$0xff]
    %v64 = vld [vmem:[%s3 + $0xe8] sm:$0xff]
    %v65 = vld [vmem:[%s3 + $0xf0] sm:$0xff]
    %v66 = vld [vmem:[%s3 + $0xf8] sm:$0xff]
    %v67 = vld [vmem:[%s3 + $0x100] sm:$0xff]
    %v68 = vld [vmem:[%s3 + $0x108] sm:$0xff]
    %v69 = vld [vmem:[%s3 + $0x110] sm:$0xff]
    %v70 = vld [vmem:[%s3 + $0x118] sm:$0xff]
    %v71 = vld [vmem:[%s3 + $0x120] sm:$0xff]
    %v72 = vld [vmem:[%s3 + $0x128] sm:$0xff]
    %v73 = vld [vmem:[%s3 + $0x130] sm:$0xff]
    %v74 = vld [vmem:[%s3 + $0x138] sm:$0xff]
    %v75 = vld [vmem:[%s3 + $0x140] sm:$0xff]
    %v76 = vld [vmem:[%s3 + $0x148] sm:$0xff]
    %v77 = vld [vmem:[%s3 + $0x150] sm:$0xff]
    %v78 = vld [vmem:[%s3 + $0x158] sm:$0xff]
    %v79 = vld [vmem:[%s3 + $0x160] sm:$0xff]
    %v80 = vld [vmem:[%s3 + $0x168] sm:$0xff]
    %v81 = vld [vmem:[%s3 + $0x170] sm:$0xff]
    %v82 = vld [vmem:[%s3 + $0x178] sm:$0xff]
    %v83 = vld [vmem:[%s3 + $0x180] sm:$0xff]
    %v84 = vld [vmem:[%s3 + $0x188] sm:$0xff]
    %v85 = vld [vmem:[%s3 + $0x190] sm:$0xff]
    %v86 = vld [vmem:[%s3 + $0x198] sm:$0xff]
    %v87 = vld [vmem:[%s3 + $0x1a0] sm:$0xff]
    %v88 = vld [vmem:[%s3 + $0x1a8] sm:$0xff]
    %v89 = vld [vmem:[%s3 + $0x1b0] sm:$0xff]
    %v90 = vld [vmem:[%s3 + $0x1b8] sm:$0xff]
    %v91 = vld [vmem:[%s3 + $0x1c0] sm:$0xff]
    %v92 = vld [vmem:[%s3 + $0x1c8] sm:$0xff]
    %v93 = vld [vmem:[%s3 + $0x1d0] sm:$0xff]
    %v94 = vld [vmem:[%s3 + $0x1d8] sm:$0xff]
    %v95 = vld [vmem:[%s3 + $0x1e0] sm:$0xff]
    %v96 = vld [vmem:[%s3 + $0x1e8] sm:$0xff]
    %v97 = vld [vmem:[%s3 + $0x1f0] sm:$0xff]
    %v98 = vld [vmem:[%s3 + $0x1f8] sm:$0xff]
    %v99 = vld [vmem:[%s3 + $0x200] sm:$0xff]
    %v100 = vld [vmem:[%s3 + $0x208] sm:$0xff]
    %v101 = vld [vmem:[%s3 + $0x210] sm:$0xff]
    %v102 = vld [vmem:[%s3 + $0x218] sm:$0xff]
    %v103 = vld [vmem:[%s3 + $0x220] sm:$0xff]
    %v104 = vld [vmem:[%s3 + $0x228] sm:$0xff]
    %v105 = vld [vmem:[%s3 + $0x230] sm:$0xff]
    %v106 = vld [vmem:[%s3 + $0x238] sm:$0xff]
    %v107 = vld [vmem:[%s3 + $0x240] sm:$0xff]
    %v108 = vld [vmem:[%s3 + $0x248] sm:$0xff]
    %v109 = vld [vmem:[%s3 + $0x250] sm:$0xff]
    %v110 = vld [vmem:[%s3 + $0x258] sm:$0xff]
    %v111 = vld [vmem:[%s3 + $0x260] sm:$0xff]
    %v112 = vld [vmem:[%s3 + $0x268] sm:$0xff]
    %v113 = vld [vmem:[%s3 + $0x270] sm:$0xff]
    %v114 = vld [vmem:[%s3 + $0x278] sm:$0xff]
    %v115 = vld [vmem:[%s3 + $0x280] sm:$0xff]
    %v116 = vld [vmem:[%s3 + $0x288] sm:$0xff]
    %v117 = vld [vmem:[%s3 + $0x290] sm:$0xff]
    %v118 = vld [vmem:[%s3 + $0x298] sm:$0xff]
    %v119 = vld [vmem:[%s3 + $0x2a0] sm:$0xff]
    %v120 = vld [vmem:[%s3 + $0x2a8] sm:$0xff]
    %v121 = vld [vmem:[%s3 + $0x2b0] sm:$0xff]
    %v122 = vld [vmem:[%s3 + $0x2b8] sm:$0xff]
    %v123 = vld [vmem:[%s3 + $0x2c0] sm:$0xff]
    %v124 = vld [vmem:[%s3 + $0x2c8] sm:$0xff]
    %v125 = vld [vmem:[%s3 + $0x2d0] sm:$0xff]
    %v126 = vld [vmem:[%s3 + $0x2d8] sm:$0xff]
    %v127 = vld [vmem:[%s3 + $0x2e0] sm:$0xff]
    %v128 = vld [vmem:[%s3 + $0x2e8] sm:$0xff]
    %v129 = vld [vmem:[%s3 + $0x2f0] sm:$0xff]
    %v130 = vld [vmem:[%s3 + $0x2f8] sm:$0xff]
    %v131 = vld [vmem:[%s3 + $0x300] sm:$0xff]
    %v132 = vld [vmem:[%s3 + $0x308] sm:$0xff]
    %v133 = vld [vmem:[%s3 + $0x310] sm:$0xff]
    %v134 = vld [vmem:[%s3 + $0x318] sm:$0xff]
    %v135 = vld [vmem:[%s3 + $0x320] sm:$0xff]
    %v136 = vld [vmem:[%s3 + $0x328] sm:$0xff]
    %v137 = vld [vmem:[%s3 + $0x330] sm:$0xff]
    %v138 = vld [vmem:[%s3 + $0x338] sm:$0xff]
    %v139 = vld [vmem:[%s3 + $0x340] sm:$0xff]
    %v140 = vld [vmem:[%s3 + $0x348] sm:$0xff]
    %v141 = vld [vmem:[%s3 + $0x350] sm:$0xff]
    %v142 = vld [vmem:[%s3 + $0x358] sm:$0xff]
    %v143 = vld [vmem:[%s3 + $0x360] sm:$0xff]
    %v144 = vld [vmem:[%s3 + $0x368] sm:$0xff]
    %v145 = vld [vmem:[%s3 + $0x370] sm:$0xff]
    %v146 = vld [vmem:[%s3 + $0x378] sm:$0xff]
    %v147 = vld [vmem:[%s3 + $0x380] sm:$0xff]
    %v148 = vld [vmem:[%s3 + $0x388] sm:$0xff]
    %v149 = vld [vmem:[%s3 + $0x390] sm:$0xff]
    %v150 = vld [vmem:[%s3 + $0x398] sm:$0xff]
    %v151 = vld [vmem:[%s3 + $0x3a0] sm:$0xff]
    %v152 = vld [vmem:[%s3 + $0x3a8] sm:$0xff]
    %v153 = vld [vmem:[%s3 + $0x3b0] sm:$0xff]
    %v154 = vld [vmem:[%s3 + $0x3b8] sm:$0xff]
    %v155 = vld [vmem:[%s3 + $0x3c0] sm:$0xff]
    %v156 = vld [vmem:[%s3 + $0x3c8] sm:$0xff]
    %v157 = vld [vmem:[%s3 + $0x3d0] sm:$0xff]
    %v158 = vld [vmem:[%s3 + $0x3d8] sm:$0xff]
    %v159 = vld [vmem:[%s3 + $0x3e0] sm:$0xff]
    %v160 = vld [vmem:[%s3 + $0x3e8] sm:$0xff]
    %v161 = vld [vmem:[%s3 + $0x3f0] sm:$0xff]
    %v162 = vld [vmem:[%s3 + $0x3f8] sm:$0xff]
    %v163 = vld [vmem:[%s1] sm:$0xff]
    %v164 = vld [vmem:[%s4] sm:$0xff]
    %v165 = vld [vmem:[%s4 + $0x8] sm:$0xff]
    %v166 = vld [vmem:[%s4 + $0x10] sm:$0xff]
    %v167 = vld [vmem:[%s4 + $0x18] sm:$0xff]
    %v168 = vld [vmem:[%s4 + $0x20] sm:$0xff]
    %v169 = vld [vmem:[%s4 + $0x28] sm:$0xff]
    %v170 = vld [vmem:[%s4 + $0x30] sm:$0xff]
    %v171 = vld [vmem:[%s4 + $0x38] sm:$0xff]
    %v172 = vld [vmem:[%s4 + $0x40] sm:$0xff]
    %v173 = vld [vmem:[%s4 + $0x48] sm:$0xff]
    %v174 = vld [vmem:[%s4 + $0x50] sm:$0xff]
    %v175 = vld [vmem:[%s4 + $0x58] sm:$0xff]
    %v176 = vld [vmem:[%s4 + $0x60] sm:$0xff]
    %v177 = vld [vmem:[%s4 + $0x68] sm:$0xff]
    %v178 = vld [vmem:[%s4 + $0x70] sm:$0xff]
    %v179 = vld [vmem:[%s4 + $0x78] sm:$0xff]
    %v180 = vld [vmem:[%s4 + $0x80] sm:$0xff]
    %v181 = vld [vmem:[%s4 + $0x88] sm:$0xff]
    %v182 = vld [vmem:[%s4 + $0x90] sm:$0xff]
    %v183 = vld [vmem:[%s4 + $0x98] sm:$0xff]
    %v184 = vld [vmem:[%s4 + $0xa0] sm:$0xff]
    %v185 = vld [vmem:[%s4 + $0xa8] sm:$0xff]
    %v186 = vld [vmem:[%s4 + $0xb0] sm:$0xff]
    %v187 = vld [vmem:[%s4 + $0xb8] sm:$0xff]
    %v188 = vld [vmem:[%s4 + $0xc0] sm:$0xff]
    %v189 = vld [vmem:[%s4 + $0xc8] sm:$0xff]
    %v190 = vld [vmem:[%s4 + $0xd0] sm:$0xff]
    %v191 = vld [vmem:[%s4 + $0xd8] sm:$0xff]
    %v192 = vld [vmem:[%s4 + $0xe0] sm:$0xff]
    %v193 = vld [vmem:[%s4 + $0xe8] sm:$0xff]
    %v194 = vld [vmem:[%s4 + $0xf0] sm:$0xff]
    %v195 = vld [vmem:[%s4 + $0xf8] sm:$0xff]
    %v196 = vld [vmem:[%s4 + $0x100] sm:$0xff]
    %v197 = vld [vmem:[%s4 + $0x108] sm:$0xff]
    %v198 = vld [vmem:[%s4 + $0x110] sm:$0xff]
    %v199 = vld [vmem:[%s4 + $0x118] sm:$0xff]
    %v200 = vld [vmem:[%s4 + $0x120] sm:$0xff]
    %v201 = vld [vmem:[%s4 + $0x128] sm:$0xff]
    %v202 = vld [vmem:[%s4 + $0x130] sm:$0xff]
    %v203 = vld [vmem:[%s4 + $0x138] sm:$0xff]
    %v204 = vld [vmem:[%s4 + $0x140] sm:$0xff]
    %v205 = vld [vmem:[%s4 + $0x148] sm:$0xff]
    %v206 = vld [vmem:[%s4 + $0x150] sm:$0xff]
    %v207 = vld [vmem:[%s4 + $0x158] sm:$0xff]
    %v208 = vld [vmem:[%s4 + $0x160] sm:$0xff]
    %v209 = vld [vmem:[%s4 + $0x168] sm:$0xff]
    %v210 = vld [vmem:[%s4 + $0x170] sm:$0xff]
    %v211 = vld [vmem:[%s4 + $0x178] sm:$0xff]
    %v212 = vld [vmem:[%s4 + $0x180] sm:$0xff]
    %v213 = vld [vmem:[%s4 + $0x188] sm:$0xff]
    %v214 = vld [vmem:[%s4 + $0x190] sm:$0xff]
    %v215 = vld [vmem:[%s4 + $0x198] sm:$0xff]
    %v216 = vld [vmem:[%s4 + $0x1a0] sm:$0xff]
    %v217 = vld [vmem:[%s4 + $0x1a8] sm:$0xff]
    %v218 = vld [vmem:[%s4 + $0x1b0] sm:$0xff]
    %v219 = vld [vmem:[%s4 + $0x1b8] sm:$0xff]
    %v220 = vld [vmem:[%s4 + $0x1c0] sm:$0xff]
    %v221 = vld [vmem:[%s4 + $0x1c8] sm:$0xff]
    %v222 = vld [vmem:[%s4 + $0x1d0] sm:$0xff]
    %v223 = vld [vmem:[%s4 + $0x1d8] sm:$0xff]
    %v224 = vld [vmem:[%s4 + $0x1e0] sm:$0xff]
    %v225 = vld [vmem:[%s4 + $0x1e8] sm:$0xff]
    %v226 = vld [vmem:[%s4 + $0x1f0] sm:$0xff]
    %v227 = vld [vmem:[%s4 + $0x1f8] sm:$0xff]
    %v228 = vld [vmem:[%s4 + $0x200] sm:$0xff]
    %v229 = vld [vmem:[%s4 + $0x208] sm:$0xff]
    %v230 = vld [vmem:[%s4 + $0x210] sm:$0xff]
    %v231 = vld [vmem:[%s4 + $0x218] sm:$0xff]
    %v232 = vld [vmem:[%s4 + $0x220] sm:$0xff]
    %v233 = vld [vmem:[%s4 + $0x228] sm:$0xff]
    %v234 = vld [vmem:[%s4 + $0x230] sm:$0xff]
    %v235 = vld [vmem:[%s4 + $0x238] sm:$0xff]
    %v236 = vld [vmem:[%s4 + $0x240] sm:$0xff]
    %v237 = vld [vmem:[%s4 + $0x248] sm:$0xff]
    %v238 = vld [vmem:[%s4 + $0x250] sm:$0xff]
    %v239 = vld [vmem:[%s4 + $0x258] sm:$0xff]
    %v240 = vld [vmem:[%s4 + $0x260] sm:$0xff]
    %v241 = vld [vmem:[%s4 + $0x268] sm:$0xff]
    %v242 = vld [vmem:[%s4 + $0x270] sm:$0xff]
    %v243 = vld [vmem:[%s4 + $0x278] sm:$0xff]
    %v244 = vld [vmem:[%s4 + $0x280] sm:$0xff]
    %v245 = vld [vmem:[%s4 + $0x288] sm:$0xff]
    %v246 = vld [vmem:[%s4 + $0x290] sm:$0xff]
    %v247 = vld [vmem:[%s4 + $0x298] sm:$0xff]
    %v248 = vld [vmem:[%s4 + $0x2a0] sm:$0xff]
    %v249 = vld [vmem:[%s4 + $0x2a8] sm:$0xff]
    %v250 = vld [vmem:[%s4 + $0x2b0] sm:$0xff]
    %v251 = vld [vmem:[%s4 + $0x2b8] sm:$0xff]
    %v252 = vld [vmem:[%s4 + $0x2c0] sm:$0xff]
    %v253 = vld [vmem:[%s4 + $0x2c8] sm:$0xff]
    %v254 = vld [vmem:[%s4 + $0x2d0] sm:$0xff]
    %v255 = vld [vmem:[%s4 + $0x2d8] sm:$0xff]
    %v256 = vld [vmem:[%s4 + $0x2e0] sm:$0xff]
    %v257 = vld [vmem:[%s4 + $0x2e8] sm:$0xff]
    %v258 = vld [vmem:[%s4 + $0x2f0] sm:$0xff]
    %v259 = vld [vmem:[%s4 + $0x2f8] sm:$0xff]
    %v260 = vld [vmem:[%s4 + $0x300] sm:$0xff]
    %v261 = vld [vmem:[%s4 + $0x308] sm:$0xff]
    %v262 = vld [vmem:[%s4 + $0x310] sm:$0xff]
    %v263 = vld [vmem:[%s4 + $0x318] sm:$0xff]
    %v264 = vld [vmem:[%s4 + $0x320] sm:$0xff]
    %v265 = vld [vmem:[%s4 + $0x328] sm:$0xff]
    %v266 = vld [vmem:[%s4 + $0x330] sm:$0xff]
    %v267 = vld [vmem:[%s4 + $0x338] sm:$0xff]
    %v268 = vld [vmem:[%s4 + $0x340] sm:$0xff]
    %v269 = vld [vmem:[%s4 + $0x348] sm:$0xff]
    %v270 = vld [vmem:[%s4 + $0x350] sm:$0xff]
    %v271 = vld [vmem:[%s4 + $0x358] sm:$0xff]
    %v272 = vld [vmem:[%s4 + $0x360] sm:$0xff]
    %v273 = vld [vmem:[%s4 + $0x368] sm:$0xff]
    %v274 = vld [vmem:[%s4 + $0x370] sm:$0xff]
    %v275 = vld [vmem:[%s4 + $0x378] sm:$0xff]
    %v276 = vld [vmem:[%s4 + $0x380] sm:$0xff]
    %v277 = vld [vmem:[%s4 + $0x388] sm:$0xff]
    %v278 = vld [vmem:[%s4 + $0x390] sm:$0xff]
    %v279 = vld [vmem:[%s4 + $0x398] sm:$0xff]
    %v280 = vld [vmem:[%s4 + $0x3a0] sm:$0xff]
    %v281 = vld [vmem:[%s4 + $0x3a8] sm:$0xff]
    %v282 = vld [vmem:[%s4 + $0x3b0] sm:$0xff]
    %v283 = vld [vmem:[%s4 + $0x3b8] sm:$0xff]
    %v284 = vld [vmem:[%s4 + $0x3c0] sm:$0xff]
    %v285 = vld [vmem:[%s4 + $0x3c8] sm:$0xff]
    %v286 = vld [vmem:[%s4 + $0x3d0] sm:$0xff]
    %v287 = vld [vmem:[%s4 + $0x3d8] sm:$0xff]
    %v288 = vld [vmem:[%s4 + $0x3e0] sm:$0xff]
    %v289 = vld [vmem:[%s4 + $0x3e8] sm:$0xff]
    %v290 = vld [vmem:[%s4 + $0x3f0] sm:$0xff]
    %v291 = vld [vmem:[%s4 + $0x3f8] sm:$0xff]
    %v293 = vcombine.high %v163, %v163
    %v295 = vunpack.c.l.s4 1966171168
    %v296 = vunpack.c.0.s8 %v295
    %v297 = vlaneseq
    %v298 = vshrl.u32 %v297, 7
    %v299 = vsub.s32 %v296, %v298
    %v300 = vrot.slane %v163, %v299
    %v302 = vunpack.c.l.s4 1966171168
    %v303 = vunpack.c.0.s8 %v302
    %v304 = vlaneseq
    %v305 = vshrl.u32 %v304, 7
    %v306 = vsub.s32 %v303, %v305
    %v307 = vrot.slane %v293, %v306
    %v308 = vcombine.high %v300, %v300
    %v309 = vcombine.high %v307, %v307
    %v311 = vunpack.c.l.s4 1966171168
    %v312 = vunpack.c.0.s8 %v311
    %v313 = vlaneseq
    %v314 = vshrl.u32 %v313, 7
    %v315 = vsub.s32 %v312, %v314
    %v316 = vrot.slane %v300, %v315
    %v318 = vunpack.c.l.s4 1966171168
    %v319 = vunpack.c.0.s8 %v318
    %v320 = vlaneseq
    %v321 = vshrl.u32 %v320, 7
    %v322 = vsub.s32 %v319, %v321
    %v323 = vrot.slane %v307, %v322
    %v325 = vunpack.c.l.s4 1966171168
    %v326 = vunpack.c.0.s8 %v325
    %v327 = vlaneseq
    %v328 = vshrl.u32 %v327, 7
    %v329 = vsub.s32 %v326, %v328
    %v330 = vrot.slane %v308, %v329
    %v332 = vunpack.c.l.s4 1966171168
    %v333 = vunpack.c.0.s8 %v332
    %v334 = vlaneseq
    %v335 = vshrl.u32 %v334, 7
    %v336 = vsub.s32 %v333, %v335
    %v337 = vrot.slane %v309, %v336
    %v338 = vcombine.high %v316, %v316
    %v339 = vcombine.high %v323, %v323
    %v340 = vcombine.high %v330, %v330
    %v341 = vcombine.high %v337, %v337
    %v478 = vunpack.c.l.b16 %v164
    %v479 = vunpack.c.h.b16 %v164
    %v480 = vunpack.c.l.b16 %v165
    %v481 = vunpack.c.h.b16 %v165
    %v482 = vunpack.c.l.b16 %v166
    %v483 = vunpack.c.h.b16 %v166
    %v484 = vunpack.c.l.b16 %v167
    %v485 = vunpack.c.h.b16 %v167
    %v486 = vunpack.c.l.b16 %v168
    %v487 = vunpack.c.h.b16 %v168
    %v488 = vunpack.c.l.b16 %v169
    %v489 = vunpack.c.h.b16 %v169
    %v490 = vunpack.c.l.b16 %v170
    %v491 = vunpack.c.h.b16 %v170
    %v492 = vunpack.c.l.b16 %v171
    %v493 = vunpack.c.h.b16 %v171
    %v494 = vunpack.c.l.b16 %v172
    %v495 = vunpack.c.h.b16 %v172
    %v496 = vunpack.c.l.b16 %v173
    %v497 = vunpack.c.h.b16 %v173
    %v498 = vunpack.c.l.b16 %v174
    %v499 = vunpack.c.h.b16 %v174
    %v500 = vunpack.c.l.b16 %v175
    %v501 = vunpack.c.h.b16 %v175
    %v502 = vunpack.c.l.b16 %v176
    %v503 = vunpack.c.h.b16 %v176
    %v504 = vunpack.c.l.b16 %v177
    %v505 = vunpack.c.h.b16 %v177
    %v506 = vunpack.c.l.b16 %v178
    %v507 = vunpack.c.h.b16 %v178
    %v508 = vunpack.c.l.b16 %v179
    %v509 = vunpack.c.h.b16 %v179
    %v510 = vunpack.c.l.b16 %v180
    %v511 = vunpack.c.h.b16 %v180
    %v512 = vunpack.c.l.b16 %v181
    %v513 = vunpack.c.h.b16 %v181
    %v514 = vunpack.c.l.b16 %v182
    %v515 = vunpack.c.h.b16 %v182
    %v516 = vunpack.c.l.b16 %v183
    %v517 = vunpack.c.h.b16 %v183
    %v518 = vunpack.c.l.b16 %v184
    %v519 = vunpack.c.h.b16 %v184
    %v520 = vunpack.c.l.b16 %v185
    %v521 = vunpack.c.h.b16 %v185
    %v522 = vunpack.c.l.b16 %v186
    %v523 = vunpack.c.h.b16 %v186
    %v524 = vunpack.c.l.b16 %v187
    %v525 = vunpack.c.h.b16 %v187
    %v526 = vunpack.c.l.b16 %v188
    %v527 = vunpack.c.h.b16 %v188
    %v528 = vunpack.c.l.b16 %v189
    %v529 = vunpack.c.h.b16 %v189
    %v530 = vunpack.c.l.b16 %v190
    %v531 = vunpack.c.h.b16 %v190
    %v532 = vunpack.c.l.b16 %v191
    %v533 = vunpack.c.h.b16 %v191
    %v534 = vunpack.c.l.b16 %v192
    %v535 = vunpack.c.h.b16 %v192
    %v536 = vunpack.c.l.b16 %v193
    %v537 = vunpack.c.h.b16 %v193
    %v538 = vunpack.c.l.b16 %v194
    %v539 = vunpack.c.h.b16 %v194
    %v540 = vunpack.c.l.b16 %v195
    %v541 = vunpack.c.h.b16 %v195
    %v542 = vunpack.c.l.b16 %v196
    %v543 = vunpack.c.h.b16 %v196
    %v544 = vunpack.c.l.b16 %v197
    %v545 = vunpack.c.h.b16 %v197
    %v546 = vunpack.c.l.b16 %v198
    %v547 = vunpack.c.h.b16 %v198
    %v548 = vunpack.c.l.b16 %v199
    %v549 = vunpack.c.h.b16 %v199
    %v550 = vunpack.c.l.b16 %v200
    %v551 = vunpack.c.h.b16 %v200
    %v552 = vunpack.c.l.b16 %v201
    %v553 = vunpack.c.h.b16 %v201
    %v554 = vunpack.c.l.b16 %v202
    %v555 = vunpack.c.h.b16 %v202
    %v556 = vunpack.c.l.b16 %v203
    %v557 = vunpack.c.h.b16 %v203
    %v558 = vunpack.c.l.b16 %v204
    %v559 = vunpack.c.h.b16 %v204
    %v560 = vunpack.c.l.b16 %v205
    %v561 = vunpack.c.h.b16 %v205
    %v562 = vunpack.c.l.b16 %v206
    %v563 = vunpack.c.h.b16 %v206
    %v564 = vunpack.c.l.b16 %v207
    %v565 = vunpack.c.h.b16 %v207
    %v566 = vunpack.c.l.b16 %v208
    %v567 = vunpack.c.h.b16 %v208
    %v568 = vunpack.c.l.b16 %v209
    %v569 = vunpack.c.h.b16 %v209
    %v570 = vunpack.c.l.b16 %v210
    %v571 = vunpack.c.h.b16 %v210
    %v572 = vunpack.c.l.b16 %v211
    %v573 = vunpack.c.h.b16 %v211
    %v574 = vunpack.c.l.b16 %v212
    %v575 = vunpack.c.h.b16 %v212
    %v576 = vunpack.c.l.b16 %v213
    %v577 = vunpack.c.h.b16 %v213
    %v578 = vunpack.c.l.b16 %v214
    %v579 = vunpack.c.h.b16 %v214
    %v580 = vunpack.c.l.b16 %v215
    %v581 = vunpack.c.h.b16 %v215
    %v582 = vunpack.c.l.b16 %v216
    %v583 = vunpack.c.h.b16 %v216
    %v584 = vunpack.c.l.b16 %v217
    %v585 = vunpack.c.h.b16 %v217
    %v586 = vunpack.c.l.b16 %v218
    %v587 = vunpack.c.h.b16 %v218
    %v588 = vunpack.c.l.b16 %v219
    %v589 = vunpack.c.h.b16 %v219
    %v590 = vunpack.c.l.b16 %v220
    %v591 = vunpack.c.h.b16 %v220
    %v592 = vunpack.c.l.b16 %v221
    %v593 = vunpack.c.h.b16 %v221
    %v594 = vunpack.c.l.b16 %v222
    %v595 = vunpack.c.h.b16 %v222
    %v596 = vunpack.c.l.b16 %v223
    %v597 = vunpack.c.h.b16 %v223
    %v598 = vunpack.c.l.b16 %v224
    %v599 = vunpack.c.h.b16 %v224
    %v600 = vunpack.c.l.b16 %v225
    %v601 = vunpack.c.h.b16 %v225
    %v602 = vunpack.c.l.b16 %v226
    %v603 = vunpack.c.h.b16 %v226
    %v604 = vunpack.c.l.b16 %v227
    %v605 = vunpack.c.h.b16 %v227
    %v606 = vunpack.c.l.b16 %v228
    %v607 = vunpack.c.h.b16 %v228
    %v608 = vunpack.c.l.b16 %v229
    %v609 = vunpack.c.h.b16 %v229
    %v610 = vunpack.c.l.b16 %v230
    %v611 = vunpack.c.h.b16 %v230
    %v612 = vunpack.c.l.b16 %v231
    %v613 = vunpack.c.h.b16 %v231
    %v614 = vunpack.c.l.b16 %v232
    %v615 = vunpack.c.h.b16 %v232
    %v616 = vunpack.c.l.b16 %v233
    %v617 = vunpack.c.h.b16 %v233
    %v618 = vunpack.c.l.b16 %v234
    %v619 = vunpack.c.h.b16 %v234
    %v620 = vunpack.c.l.b16 %v235
    %v621 = vunpack.c.h.b16 %v235
    %v622 = vunpack.c.l.b16 %v236
    %v623 = vunpack.c.h.b16 %v236
    %v624 = vunpack.c.l.b16 %v237
    %v625 = vunpack.c.h.b16 %v237
    %v626 = vunpack.c.l.b16 %v238
    %v627 = vunpack.c.h.b16 %v238
    %v628 = vunpack.c.l.b16 %v239
    %v629 = vunpack.c.h.b16 %v239
    %v630 = vunpack.c.l.b16 %v240
    %v631 = vunpack.c.h.b16 %v240
    %v632 = vunpack.c.l.b16 %v241
    %v633 = vunpack.c.h.b16 %v241
    %v634 = vunpack.c.l.b16 %v242
    %v635 = vunpack.c.h.b16 %v242
    %v636 = vunpack.c.l.b16 %v243
    %v637 = vunpack.c.h.b16 %v243
    %v638 = vunpack.c.l.b16 %v244
    %v639 = vunpack.c.h.b16 %v244
    %v640 = vunpack.c.l.b16 %v245
    %v641 = vunpack.c.h.b16 %v245
    %v642 = vunpack.c.l.b16 %v246
    %v643 = vunpack.c.h.b16 %v246
    %v644 = vunpack.c.l.b16 %v247
    %v645 = vunpack.c.h.b16 %v247
    %v646 = vunpack.c.l.b16 %v248
    %v647 = vunpack.c.h.b16 %v248
    %v648 = vunpack.c.l.b16 %v249
    %v649 = vunpack.c.h.b16 %v249
    %v650 = vunpack.c.l.b16 %v250
    %v651 = vunpack.c.h.b16 %v250
    %v652 = vunpack.c.l.b16 %v251
    %v653 = vunpack.c.h.b16 %v251
    %v654 = vunpack.c.l.b16 %v252
    %v655 = vunpack.c.h.b16 %v252
    %v656 = vunpack.c.l.b16 %v253
    %v657 = vunpack.c.h.b16 %v253
    %v658 = vunpack.c.l.b16 %v254
    %v659 = vunpack.c.h.b16 %v254
    %v660 = vunpack.c.l.b16 %v255
    %v661 = vunpack.c.h.b16 %v255
    %v662 = vunpack.c.l.b16 %v256
    %v663 = vunpack.c.h.b16 %v256
    %v664 = vunpack.c.l.b16 %v257
    %v665 = vunpack.c.h.b16 %v257
    %v666 = vunpack.c.l.b16 %v258
    %v667 = vunpack.c.h.b16 %v258
    %v668 = vunpack.c.l.b16 %v259
    %v669 = vunpack.c.h.b16 %v259
    %v670 = vunpack.c.l.b16 %v260
    %v671 = vunpack.c.h.b16 %v260
    %v672 = vunpack.c.l.b16 %v261
    %v673 = vunpack.c.h.b16 %v261
    %v674 = vunpack.c.l.b16 %v262
    %v675 = vunpack.c.h.b16 %v262
    %v676 = vunpack.c.l.b16 %v263
    %v677 = vunpack.c.h.b16 %v263
    %v678 = vunpack.c.l.b16 %v264
    %v679 = vunpack.c.h.b16 %v264
    %v680 = vunpack.c.l.b16 %v265
    %v681 = vunpack.c.h.b16 %v265
    %v682 = vunpack.c.l.b16 %v266
    %v683 = vunpack.c.h.b16 %v266
    %v684 = vunpack.c.l.b16 %v267
    %v685 = vunpack.c.h.b16 %v267
    %v686 = vunpack.c.l.b16 %v268
    %v687 = vunpack.c.h.b16 %v268
    %v688 = vunpack.c.l.b16 %v269
    %v689 = vunpack.c.h.b16 %v269
    %v690 = vunpack.c.l.b16 %v270
    %v691 = vunpack.c.h.b16 %v270
    %v692 = vunpack.c.l.b16 %v271
    %v693 = vunpack.c.h.b16 %v271
    %v694 = vunpack.c.l.b16 %v272
    %v695 = vunpack.c.h.b16 %v272
    %v696 = vunpack.c.l.b16 %v273
    %v697 = vunpack.c.h.b16 %v273
    %v698 = vunpack.c.l.b16 %v274
    %v699 = vunpack.c.h.b16 %v274
    %v700 = vunpack.c.l.b16 %v275
    %v701 = vunpack.c.h.b16 %v275
    %v702 = vunpack.c.l.b16 %v276
    %v703 = vunpack.c.h.b16 %v276
    %v704 = vunpack.c.l.b16 %v277
    %v705 = vunpack.c.h.b16 %v277
    %v706 = vunpack.c.l.b16 %v278
    %v707 = vunpack.c.h.b16 %v278
    %v708 = vunpack.c.l.b16 %v279
    %v709 = vunpack.c.h.b16 %v279
    %v710 = vunpack.c.l.b16 %v280
    %v711 = vunpack.c.h.b16 %v280
    %v712 = vunpack.c.l.b16 %v281
    %v713 = vunpack.c.h.b16 %v281
    %v714 = vunpack.c.l.b16 %v282
    %v715 = vunpack.c.h.b16 %v282
    %v716 = vunpack.c.l.b16 %v283
    %v717 = vunpack.c.h.b16 %v283
    %v718 = vunpack.c.l.b16 %v284
    %v719 = vunpack.c.h.b16 %v284
    %v720 = vunpack.c.l.b16 %v285
    %v721 = vunpack.c.h.b16 %v285
    %v722 = vunpack.c.l.b16 %v286
    %v723 = vunpack.c.h.b16 %v286
    %v724 = vunpack.c.l.b16 %v287
    %v725 = vunpack.c.h.b16 %v287
    %v726 = vunpack.c.l.b16 %v288
    %v727 = vunpack.c.h.b16 %v288
    %v728 = vunpack.c.l.b16 %v289
    %v729 = vunpack.c.h.b16 %v289
    %v730 = vunpack.c.l.b16 %v290
    %v731 = vunpack.c.h.b16 %v290
    %v732 = vunpack.c.l.b16 %v291
    %v733 = vunpack.c.h.b16 %v291
    %v734 = vpack.c.b16 %v480, %v478
    %v735 = vpack.c.b16 %v481, %v479
    %v736 = vpack.c.b16 %v484, %v482
    %v737 = vpack.c.b16 %v485, %v483
    %v738 = vpack.c.b16 %v488, %v486
    %v739 = vpack.c.b16 %v489, %v487
    %v740 = vpack.c.b16 %v492, %v490
    %v741 = vpack.c.b16 %v493, %v491
    %v742 = vpack.c.b16 %v496, %v494
    %v743 = vpack.c.b16 %v497, %v495
    %v744 = vpack.c.b16 %v500, %v498
    %v745 = vpack.c.b16 %v501, %v499
    %v746 = vpack.c.b16 %v504, %v502
    %v747 = vpack.c.b16 %v505, %v503
    %v748 = vpack.c.b16 %v508, %v506
    %v749 = vpack.c.b16 %v509, %v507
    %v750 = vpack.c.b16 %v512, %v510
    %v751 = vpack.c.b16 %v513, %v511
    %v752 = vpack.c.b16 %v516, %v514
    %v753 = vpack.c.b16 %v517, %v515
    %v754 = vpack.c.b16 %v520, %v518
    %v755 = vpack.c.b16 %v521, %v519
    %v756 = vpack.c.b16 %v524, %v522
    %v757 = vpack.c.b16 %v525, %v523
    %v758 = vpack.c.b16 %v528, %v526
    %v759 = vpack.c.b16 %v529, %v527
    %v760 = vpack.c.b16 %v532, %v530
    %v761 = vpack.c.b16 %v533, %v531
    %v762 = vpack.c.b16 %v536, %v534
    %v763 = vpack.c.b16 %v537, %v535
    %v764 = vpack.c.b16 %v540, %v538
    %v765 = vpack.c.b16 %v541, %v539
    %v766 = vpack.c.b16 %v544, %v542
    %v767 = vpack.c.b16 %v545, %v543
    %v768 = vpack.c.b16 %v548, %v546
    %v769 = vpack.c.b16 %v549, %v547
    %v770 = vpack.c.b16 %v552, %v550
    %v771 = vpack.c.b16 %v553, %v551
    %v772 = vpack.c.b16 %v556, %v554
    %v773 = vpack.c.b16 %v557, %v555
    %v774 = vpack.c.b16 %v560, %v558
    %v775 = vpack.c.b16 %v561, %v559
    %v776 = vpack.c.b16 %v564, %v562
    %v777 = vpack.c.b16 %v565, %v563
    %v778 = vpack.c.b16 %v568, %v566
    %v779 = vpack.c.b16 %v569, %v567
    %v780 = vpack.c.b16 %v572, %v570
    %v781 = vpack.c.b16 %v573, %v571
    %v782 = vpack.c.b16 %v576, %v574
    %v783 = vpack.c.b16 %v577, %v575
    %v784 = vpack.c.b16 %v580, %v578
    %v785 = vpack.c.b16 %v581, %v579
    %v786 = vpack.c.b16 %v584, %v582
    %v787 = vpack.c.b16 %v585, %v583
    %v788 = vpack.c.b16 %v588, %v586
    %v789 = vpack.c.b16 %v589, %v587
    %v790 = vpack.c.b16 %v592, %v590
    %v791 = vpack.c.b16 %v593, %v591
    %v792 = vpack.c.b16 %v596, %v594
    %v793 = vpack.c.b16 %v597, %v595
    %v794 = vpack.c.b16 %v600, %v598
    %v795 = vpack.c.b16 %v601, %v599
    %v796 = vpack.c.b16 %v604, %v602
    %v797 = vpack.c.b16 %v605, %v603
    %v798 = vpack.c.b16 %v608, %v606
    %v799 = vpack.c.b16 %v609, %v607
    %v800 = vpack.c.b16 %v612, %v610
    %v801 = vpack.c.b16 %v613, %v611
    %v802 = vpack.c.b16 %v616, %v614
    %v803 = vpack.c.b16 %v617, %v615
    %v804 = vpack.c.b16 %v620, %v618
    %v805 = vpack.c.b16 %v621, %v619
    %v806 = vpack.c.b16 %v624, %v622
    %v807 = vpack.c.b16 %v625, %v623
    %v808 = vpack.c.b16 %v628, %v626
    %v809 = vpack.c.b16 %v629, %v627
    %v810 = vpack.c.b16 %v632, %v630
    %v811 = vpack.c.b16 %v633, %v631
    %v812 = vpack.c.b16 %v636, %v634
    %v813 = vpack.c.b16 %v637, %v635
    %v814 = vpack.c.b16 %v640, %v638
    %v815 = vpack.c.b16 %v641, %v639
    %v816 = vpack.c.b16 %v644, %v642
    %v817 = vpack.c.b16 %v645, %v643
    %v818 = vpack.c.b16 %v648, %v646
    %v819 = vpack.c.b16 %v649, %v647
    %v820 = vpack.c.b16 %v652, %v650
    %v821 = vpack.c.b16 %v653, %v651
    %v822 = vpack.c.b16 %v656, %v654
    %v823 = vpack.c.b16 %v657, %v655
    %v824 = vpack.c.b16 %v660, %v658
    %v825 = vpack.c.b16 %v661, %v659
    %v826 = vpack.c.b16 %v664, %v662
    %v827 = vpack.c.b16 %v665, %v663
    %v828 = vpack.c.b16 %v668, %v666
    %v829 = vpack.c.b16 %v669, %v667
    %v830 = vpack.c.b16 %v672, %v670
    %v831 = vpack.c.b16 %v673, %v671
    %v832 = vpack.c.b16 %v676, %v674
    %v833 = vpack.c.b16 %v677, %v675
    %v834 = vpack.c.b16 %v680, %v678
    %v835 = vpack.c.b16 %v681, %v679
    %v836 = vpack.c.b16 %v684, %v682
    %v837 = vpack.c.b16 %v685, %v683
    %v838 = vpack.c.b16 %v688, %v686
    %v839 = vpack.c.b16 %v689, %v687
    %v840 = vpack.c.b16 %v692, %v690
    %v841 = vpack.c.b16 %v693, %v691
    %v842 = vpack.c.b16 %v696, %v694
    %v843 = vpack.c.b16 %v697, %v695
    %v844 = vpack.c.b16 %v700, %v698
    %v845 = vpack.c.b16 %v701, %v699
    %v846 = vpack.c.b16 %v704, %v702
    %v847 = vpack.c.b16 %v705, %v703
    %v848 = vpack.c.b16 %v708, %v706
    %v849 = vpack.c.b16 %v709, %v707
    %v850 = vpack.c.b16 %v712, %v710
    %v851 = vpack.c.b16 %v713, %v711
    %v852 = vpack.c.b16 %v716, %v714
    %v853 = vpack.c.b16 %v717, %v715
    %v854 = vpack.c.b16 %v720, %v718
    %v855 = vpack.c.b16 %v721, %v719
    %v856 = vpack.c.b16 %v724, %v722
    %v857 = vpack.c.b16 %v725, %v723
    %v858 = vpack.c.b16 %v728, %v726
    %v859 = vpack.c.b16 %v729, %v727
    %v860 = vpack.c.b16 %v732, %v730
    %v861 = vpack.c.b16 %v733, %v731
    %990 = vmatprep.subr.bf16.mxu0 %v735
    %991 = vmatpush1.bf16.msra.mxu0 %v734
    %992 = vmatprep.subr.bf16.mxu0 %v737
    %993 = vmatpush1.bf16.msra.mxu0 %v736
    %994 = vmatprep.subr.bf16.mxu0 %v739
    %995 = vmatpush1.bf16.msra.mxu0 %v738
    %996 = vmatprep.subr.bf16.mxu0 %v741
    %997 = vmatpush1.bf16.msra.mxu0 %v740
    %998 = vmatprep.subr.bf16.mxu0 %v743
    %999 = vmatpush1.bf16.msra.mxu0 %v742
    %1000 = vmatprep.subr.bf16.mxu0 %v745
    %1001 = vmatpush1.bf16.msra.mxu0 %v744
    %1002 = vmatprep.subr.bf16.mxu0 %v747
    %1003 = vmatpush1.bf16.msra.mxu0 %v746
    %1004 = vmatprep.subr.bf16.mxu0 %v749
    %1005 = vmatpush1.bf16.msra.mxu0 %v748
    %1006 = vmatprep.subr.bf16.mxu0 %v751
    %1007 = vmatpush1.bf16.msra.mxu0 %v750
    %1008 = vmatprep.subr.bf16.mxu0 %v753
    %1009 = vmatpush1.bf16.msra.mxu0 %v752
    %1010 = vmatprep.subr.bf16.mxu0 %v755
    %1011 = vmatpush1.bf16.msra.mxu0 %v754
    %1012 = vmatprep.subr.bf16.mxu0 %v757
    %1013 = vmatpush1.bf16.msra.mxu0 %v756
    %1014 = vmatprep.subr.bf16.mxu0 %v759
    %1015 = vmatpush1.bf16.msra.mxu0 %v758
    %1016 = vmatprep.subr.bf16.mxu0 %v761
    %1017 = vmatpush1.bf16.msra.mxu0 %v760
    %1018 = vmatprep.subr.bf16.mxu0 %v763
    %1019 = vmatpush1.bf16.msra.mxu0 %v762
    %1020 = vmatprep.subr.bf16.mxu0 %v765
    %1021 = vmatpush1.bf16.msra.mxu0 %v764
    %1022 = vmatprep.mubr.bf16.mxu0 %v330
    %1023 = vmatmul.mubr.bf16.gmra.mrb[0].mxu0 %v316
    %v1024 = vpop.f32.mrb[0].mxu0
    %v1025 = vadd.f32 0.0, %v1024
    %v1026 = vpop.f32.mrb[0].mxu0
    %v1027 = vadd.f32 0.0, %v1026
    %v1028 = vpop.f32.mrb[0].mxu0
    %v1029 = vpop.f32.mrb[0].mxu0
    %1030 = vdwg.mxu0
    %1031 = vmatprep.subr.bf16.mxu0 %v767
    %1032 = vmatpush1.bf16.msra.mxu0 %v766
    %1033 = vmatprep.subr.bf16.mxu0 %v769
    %1034 = vmatpush1.bf16.msra.mxu0 %v768
    %1035 = vmatprep.subr.bf16.mxu0 %v771
    %1036 = vmatpush1.bf16.msra.mxu0 %v770
    %1037 = vmatprep.subr.bf16.mxu0 %v773
    %1038 = vmatpush1.bf16.msra.mxu0 %v772
    %1039 = vmatprep.subr.bf16.mxu0 %v775
    %1040 = vmatpush1.bf16.msra.mxu0 %v774
    %1041 = vmatprep.subr.bf16.mxu0 %v777
    %1042 = vmatpush1.bf16.msra.mxu0 %v776
    %1043 = vmatprep.subr.bf16.mxu0 %v779
    %1044 = vmatpush1.bf16.msra.mxu0 %v778
    %1045 = vmatprep.subr.bf16.mxu0 %v781
    %1046 = vmatpush1.bf16.msra.mxu0 %v780
    %1047 = vmatprep.subr.bf16.mxu0 %v783
    %1048 = vmatpush1.bf16.msra.mxu0 %v782
    %1049 = vmatprep.subr.bf16.mxu0 %v785
    %1050 = vmatpush1.bf16.msra.mxu0 %v784
    %1051 = vmatprep.subr.bf16.mxu0 %v787
    %1052 = vmatpush1.bf16.msra.mxu0 %v786
    %1053 = vmatprep.subr.bf16.mxu0 %v789
    %1054 = vmatpush1.bf16.msra.mxu0 %v788
    %1055 = vmatprep.subr.bf16.mxu0 %v791
    %1056 = vmatpush1.bf16.msra.mxu0 %v790
    %1057 = vmatprep.subr.bf16.mxu0 %v793
    %1058 = vmatpush1.bf16.msra.mxu0 %v792
    %1059 = vmatprep.subr.bf16.mxu0 %v795
    %1060 = vmatpush1.bf16.msra.mxu0 %v794
    %1061 = vmatprep.subr.bf16.mxu0 %v797
    %1062 = vmatpush1.bf16.msra.mxu0 %v796
    %1063 = vmatprep.mubr.bf16.mxu0 %v340
    %1064 = vmatmul.mubr.bf16.gmra.mrb[0].mxu0 %v338
    %v1065 = vpop.f32.mrb[0].mxu0
    %v1066 = vadd.f32 %v1025, %v1065
    %v1067 = vpop.f32.mrb[0].mxu0
    %v1068 = vadd.f32 %v1027, %v1067
    %v1069 = vpop.f32.mrb[0].mxu0
    %v1070 = vpop.f32.mrb[0].mxu0
    %1071 = vdwg.mxu0
    %1072 = vmatprep.subr.bf16.mxu0 %v799
    %1073 = vmatpush1.bf16.msra.mxu0 %v798
    %1074 = vmatprep.subr.bf16.mxu0 %v801
    %1075 = vmatpush1.bf16.msra.mxu0 %v800
    %1076 = vmatprep.subr.bf16.mxu0 %v803
    %1077 = vmatpush1.bf16.msra.mxu0 %v802
    %1078 = vmatprep.subr.bf16.mxu0 %v805
    %1079 = vmatpush1.bf16.msra.mxu0 %v804
    %1080 = vmatprep.subr.bf16.mxu0 %v807
    %1081 = vmatpush1.bf16.msra.mxu0 %v806
    %1082 = vmatprep.subr.bf16.mxu0 %v809
    %1083 = vmatpush1.bf16.msra.mxu0 %v808
    %1084 = vmatprep.subr.bf16.mxu0 %v811
    %1085 = vmatpush1.bf16.msra.mxu0 %v810
    %1086 = vmatprep.subr.bf16.mxu0 %v813
    %1087 = vmatpush1.bf16.msra.mxu0 %v812
    %1088 = vmatprep.subr.bf16.mxu0 %v815
    %1089 = vmatpush1.bf16.msra.mxu0 %v814
    %1090 = vmatprep.subr.bf16.mxu0 %v817
    %1091 = vmatpush1.bf16.msra.mxu0 %v816
    %1092 = vmatprep.subr.bf16.mxu0 %v819
    %1093 = vmatpush1.bf16.msra.mxu0 %v818
    %1094 = vmatprep.subr.bf16.mxu0 %v821
    %1095 = vmatpush1.bf16.msra.mxu0 %v820
    %1096 = vmatprep.subr.bf16.mxu0 %v823
    %1097 = vmatpush1.bf16.msra.mxu0 %v822
    %1098 = vmatprep.subr.bf16.mxu0 %v825
    %1099 = vmatpush1.bf16.msra.mxu0 %v824
    %1100 = vmatprep.subr.bf16.mxu0 %v827
    %1101 = vmatpush1.bf16.msra.mxu0 %v826
    %1102 = vmatprep.subr.bf16.mxu0 %v829
    %1103 = vmatpush1.bf16.msra.mxu0 %v828
    %1104 = vmatprep.mubr.bf16.mxu0 %v337
    %1105 = vmatmul.mubr.bf16.gmra.mrb[0].mxu0 %v323
    %v1106 = vpop.f32.mrb[0].mxu0
    %v1107 = vadd.f32 %v1066, %v1106
    %v1108 = vpop.f32.mrb[0].mxu0
    %v1109 = vadd.f32 %v1068, %v1108
    %v1110 = vpop.f32.mrb[0].mxu0
    %v1111 = vpop.f32.mrb[0].mxu0
    %1112 = vdwg.mxu0
    %1113 = vmatprep.subr.bf16.mxu0 %v831
    %1114 = vmatpush1.bf16.msra.mxu0 %v830
    %1115 = vmatprep.subr.bf16.mxu0 %v833
    %1116 = vmatpush1.bf16.msra.mxu0 %v832
    %1117 = vmatprep.subr.bf16.mxu0 %v835
    %1118 = vmatpush1.bf16.msra.mxu0 %v834
    %1119 = vmatprep.subr.bf16.mxu0 %v837
    %1120 = vmatpush1.bf16.msra.mxu0 %v836
    %1121 = vmatprep.subr.bf16.mxu0 %v839
    %1122 = vmatpush1.bf16.msra.mxu0 %v838
    %1123 = vmatprep.subr.bf16.mxu0 %v841
    %1124 = vmatpush1.bf16.msra.mxu0 %v840
    %1125 = vmatprep.subr.bf16.mxu0 %v843
    %1126 = vmatpush1.bf16.msra.mxu0 %v842
    %1127 = vmatprep.subr.bf16.mxu0 %v845
    %1128 = vmatpush1.bf16.msra.mxu0 %v844
    %1129 = vmatprep.subr.bf16.mxu0 %v847
    %1130 = vmatpush1.bf16.msra.mxu0 %v846
    %1131 = vmatprep.subr.bf16.mxu0 %v849
    %1132 = vmatpush1.bf16.msra.mxu0 %v848
    %1133 = vmatprep.subr.bf16.mxu0 %v851
    %1134 = vmatpush1.bf16.msra.mxu0 %v850
    %1135 = vmatprep.subr.bf16.mxu0 %v853
    %1136 = vmatpush1.bf16.msra.mxu0 %v852
    %1137 = vmatprep.subr.bf16.mxu0 %v855
    %1138 = vmatpush1.bf16.msra.mxu0 %v854
    %1139 = vmatprep.subr.bf16.mxu0 %v857
    %1140 = vmatpush1.bf16.msra.mxu0 %v856
    %1141 = vmatprep.subr.bf16.mxu0 %v859
    %1142 = vmatpush1.bf16.msra.mxu0 %v858
    %1143 = vmatprep.subr.bf16.mxu0 %v861
    %1144 = vmatpush1.bf16.msra.mxu0 %v860
    %1145 = vmatprep.mubr.bf16.mxu0 %v341
    %1146 = vmatmul.mubr.bf16.gmra.mrb[0].mxu0 %v339
    %v1147 = vpop.f32.mrb[0].mxu0
    %v1148 = vadd.f32 %v1107, %v1147
    %v1149 = vpop.f32.mrb[0].mxu0
    %v1150 = vadd.f32 %v1109, %v1149
    %v1151 = vpop.f32.mrb[0].mxu0
    %v1152 = vpop.f32.mrb[0].mxu0
    %1153 = vdwg.mxu0
    %v1155 = vcombine.high %v34, %v34
    %v1157 = vunpack.c.l.s4 1966171168
    %v1158 = vunpack.c.0.s8 %v1157
    %v1159 = vlaneseq
    %v1160 = vshrl.u32 %v1159, 7
    %v1161 = vsub.s32 %v1158, %v1160
    %v1162 = vrot.slane %v34, %v1161
    %v1164 = vunpack.c.l.s4 1966171168
    %v1165 = vunpack.c.0.s8 %v1164
    %v1166 = vlaneseq
    %v1167 = vshrl.u32 %v1166, 7
    %v1168 = vsub.s32 %v1165, %v1167
    %v1169 = vrot.slane %v1155, %v1168
    %v1170 = vcombine.high %v1162, %v1162
    %v1171 = vcombine.high %v1169, %v1169
    %v1173 = vunpack.c.l.s4 1966171168
    %v1174 = vunpack.c.0.s8 %v1173
    %v1175 = vlaneseq
    %v1176 = vshrl.u32 %v1175, 7
    %v1177 = vsub.s32 %v1174, %v1176
    %v1178 = vrot.slane %v1162, %v1177
    %v1180 = vunpack.c.l.s4 1966171168
    %v1181 = vunpack.c.0.s8 %v1180
    %v1182 = vlaneseq
    %v1183 = vshrl.u32 %v1182, 7
    %v1184 = vsub.s32 %v1181, %v1183
    %v1185 = vrot.slane %v1169, %v1184
    %v1187 = vunpack.c.l.s4 1966171168
    %v1188 = vunpack.c.0.s8 %v1187
    %v1189 = vlaneseq
    %v1190 = vshrl.u32 %v1189, 7
    %v1191 = vsub.s32 %v1188, %v1190
    %v1192 = vrot.slane %v1170, %v1191
    %v1194 = vunpack.c.l.s4 1966171168
    %v1195 = vunpack.c.0.s8 %v1194
    %v1196 = vlaneseq
    %v1197 = vshrl.u32 %v1196, 7
    %v1198 = vsub.s32 %v1195, %v1197
    %v1199 = vrot.slane %v1171, %v1198
    %v1200 = vcombine.high %v1178, %v1178
    %v1201 = vcombine.high %v1185, %v1185
    %v1202 = vcombine.high %v1192, %v1192
    %v1203 = vcombine.high %v1199, %v1199
    %v1340 = vunpack.c.l.b16 %v35
    %v1341 = vunpack.c.h.b16 %v35
    %v1342 = vunpack.c.l.b16 %v36
    %v1343 = vunpack.c.h.b16 %v36
    %v1344 = vunpack.c.l.b16 %v37
    %v1345 = vunpack.c.h.b16 %v37
    %v1346 = vunpack.c.l.b16 %v38
    %v1347 = vunpack.c.h.b16 %v38
    %v1348 = vunpack.c.l.b16 %v39
    %v1349 = vunpack.c.h.b16 %v39
    %v1350 = vunpack.c.l.b16 %v40
    %v1351 = vunpack.c.h.b16 %v40
    %v1352 = vunpack.c.l.b16 %v41
    %v1353 = vunpack.c.h.b16 %v41
    %v1354 = vunpack.c.l.b16 %v42
    %v1355 = vunpack.c.h.b16 %v42
    %v1356 = vunpack.c.l.b16 %v43
    %v1357 = vunpack.c.h.b16 %v43
    %v1358 = vunpack.c.l.b16 %v44
    %v1359 = vunpack.c.h.b16 %v44
    %v1360 = vunpack.c.l.b16 %v45
    %v1361 = vunpack.c.h.b16 %v45
    %v1362 = vunpack.c.l.b16 %v46
    %v1363 = vunpack.c.h.b16 %v46
    %v1364 = vunpack.c.l.b16 %v47
    %v1365 = vunpack.c.h.b16 %v47
    %v1366 = vunpack.c.l.b16 %v48
    %v1367 = vunpack.c.h.b16 %v48
    %v1368 = vunpack.c.l.b16 %v49
    %v1369 = vunpack.c.h.b16 %v49
    %v1370 = vunpack.c.l.b16 %v50
    %v1371 = vunpack.c.h.b16 %v50
    %v1372 = vunpack.c.l.b16 %v51
    %v1373 = vunpack.c.h.b16 %v51
    %v1374 = vunpack.c.l.b16 %v52
    %v1375 = vunpack.c.h.b16 %v52
    %v1376 = vunpack.c.l.b16 %v53
    %v1377 = vunpack.c.h.b16 %v53
    %v1378 = vunpack.c.l.b16 %v54
    %v1379 = vunpack.c.h.b16 %v54
    %v1380 = vunpack.c.l.b16 %v55
    %v1381 = vunpack.c.h.b16 %v55
    %v1382 = vunpack.c.l.b16 %v56
    %v1383 = vunpack.c.h.b16 %v56
    %v1384 = vunpack.c.l.b16 %v57
    %v1385 = vunpack.c.h.b16 %v57
    %v1386 = vunpack.c.l.b16 %v58
    %v1387 = vunpack.c.h.b16 %v58
    %v1388 = vunpack.c.l.b16 %v59
    %v1389 = vunpack.c.h.b16 %v59
    %v1390 = vunpack.c.l.b16 %v60
    %v1391 = vunpack.c.h.b16 %v60
    %v1392 = vunpack.c.l.b16 %v61
    %v1393 = vunpack.c.h.b16 %v61
    %v1394 = vunpack.c.l.b16 %v62
    %v1395 = vunpack.c.h.b16 %v62
    %v1396 = vunpack.c.l.b16 %v63
    %v1397 = vunpack.c.h.b16 %v63
    %v1398 = vunpack.c.l.b16 %v64
    %v1399 = vunpack.c.h.b16 %v64
    %v1400 = vunpack.c.l.b16 %v65
    %v1401 = vunpack.c.h.b16 %v65
    %v1402 = vunpack.c.l.b16 %v66
    %v1403 = vunpack.c.h.b16 %v66
    %v1404 = vunpack.c.l.b16 %v67
    %v1405 = vunpack.c.h.b16 %v67
    %v1406 = vunpack.c.l.b16 %v68
    %v1407 = vunpack.c.h.b16 %v68
    %v1408 = vunpack.c.l.b16 %v69
    %v1409 = vunpack.c.h.b16 %v69
    %v1410 = vunpack.c.l.b16 %v70
    %v1411 = vunpack.c.h.b16 %v70
    %v1412 = vunpack.c.l.b16 %v71
    %v1413 = vunpack.c.h.b16 %v71
    %v1414 = vunpack.c.l.b16 %v72
    %v1415 = vunpack.c.h.b16 %v72
    %v1416 = vunpack.c.l.b16 %v73
    %v1417 = vunpack.c.h.b16 %v73
    %v1418 = vunpack.c.l.b16 %v74
    %v1419 = vunpack.c.h.b16 %v74
    %v1420 = vunpack.c.l.b16 %v75
    %v1421 = vunpack.c.h.b16 %v75
    %v1422 = vunpack.c.l.b16 %v76
    %v1423 = vunpack.c.h.b16 %v76
    %v1424 = vunpack.c.l.b16 %v77
    %v1425 = vunpack.c.h.b16 %v77
    %v1426 = vunpack.c.l.b16 %v78
    %v1427 = vunpack.c.h.b16 %v78
    %v1428 = vunpack.c.l.b16 %v79
    %v1429 = vunpack.c.h.b16 %v79
    %v1430 = vunpack.c.l.b16 %v80
    %v1431 = vunpack.c.h.b16 %v80
    %v1432 = vunpack.c.l.b16 %v81
    %v1433 = vunpack.c.h.b16 %v81
    %v1434 = vunpack.c.l.b16 %v82
    %v1435 = vunpack.c.h.b16 %v82
    %v1436 = vunpack.c.l.b16 %v83
    %v1437 = vunpack.c.h.b16 %v83
    %v1438 = vunpack.c.l.b16 %v84
    %v1439 = vunpack.c.h.b16 %v84
    %v1440 = vunpack.c.l.b16 %v85
    %v1441 = vunpack.c.h.b16 %v85
    %v1442 = vunpack.c.l.b16 %v86
    %v1443 = vunpack.c.h.b16 %v86
    %v1444 = vunpack.c.l.b16 %v87
    %v1445 = vunpack.c.h.b16 %v87
    %v1446 = vunpack.c.l.b16 %v88
    %v1447 = vunpack.c.h.b16 %v88
    %v1448 = vunpack.c.l.b16 %v89
    %v1449 = vunpack.c.h.b16 %v89
    %v1450 = vunpack.c.l.b16 %v90
    %v1451 = vunpack.c.h.b16 %v90
    %v1452 = vunpack.c.l.b16 %v91
    %v1453 = vunpack.c.h.b16 %v91
    %v1454 = vunpack.c.l.b16 %v92
    %v1455 = vunpack.c.h.b16 %v92
    %v1456 = vunpack.c.l.b16 %v93
    %v1457 = vunpack.c.h.b16 %v93
    %v1458 = vunpack.c.l.b16 %v94
    %v1459 = vunpack.c.h.b16 %v94
    %v1460 = vunpack.c.l.b16 %v95
    %v1461 = vunpack.c.h.b16 %v95
    %v1462 = vunpack.c.l.b16 %v96
    %v1463 = vunpack.c.h.b16 %v96
    %v1464 = vunpack.c.l.b16 %v97
    %v1465 = vunpack.c.h.b16 %v97
    %v1466 = vunpack.c.l.b16 %v98
    %v1467 = vunpack.c.h.b16 %v98
    %v1468 = vunpack.c.l.b16 %v99
    %v1469 = vunpack.c.h.b16 %v99
    %v1470 = vunpack.c.l.b16 %v100
    %v1471 = vunpack.c.h.b16 %v100
    %v1472 = vunpack.c.l.b16 %v101
    %v1473 = vunpack.c.h.b16 %v101
    %v1474 = vunpack.c.l.b16 %v102
    %v1475 = vunpack.c.h.b16 %v102
    %v1476 = vunpack.c.l.b16 %v103
    %v1477 = vunpack.c.h.b16 %v103
    %v1478 = vunpack.c.l.b16 %v104
    %v1479 = vunpack.c.h.b16 %v104
    %v1480 = vunpack.c.l.b16 %v105
    %v1481 = vunpack.c.h.b16 %v105
    %v1482 = vunpack.c.l.b16 %v106
    %v1483 = vunpack.c.h.b16 %v106
    %v1484 = vunpack.c.l.b16 %v107
    %v1485 = vunpack.c.h.b16 %v107
    %v1486 = vunpack.c.l.b16 %v108
    %v1487 = vunpack.c.h.b16 %v108
    %v1488 = vunpack.c.l.b16 %v109
    %v1489 = vunpack.c.h.b16 %v109
    %v1490 = vunpack.c.l.b16 %v110
    %v1491 = vunpack.c.h.b16 %v110
    %v1492 = vunpack.c.l.b16 %v111
    %v1493 = vunpack.c.h.b16 %v111
    %v1494 = vunpack.c.l.b16 %v112
    %v1495 = vunpack.c.h.b16 %v112
    %v1496 = vunpack.c.l.b16 %v113
    %v1497 = vunpack.c.h.b16 %v113
    %v1498 = vunpack.c.l.b16 %v114
    %v1499 = vunpack.c.h.b16 %v114
    %v1500 = vunpack.c.l.b16 %v115
    %v1501 = vunpack.c.h.b16 %v115
    %v1502 = vunpack.c.l.b16 %v116
    %v1503 = vunpack.c.h.b16 %v116
    %v1504 = vunpack.c.l.b16 %v117
    %v1505 = vunpack.c.h.b16 %v117
    %v1506 = vunpack.c.l.b16 %v118
    %v1507 = vunpack.c.h.b16 %v118
    %v1508 = vunpack.c.l.b16 %v119
    %v1509 = vunpack.c.h.b16 %v119
    %v1510 = vunpack.c.l.b16 %v120
    %v1511 = vunpack.c.h.b16 %v120
    %v1512 = vunpack.c.l.b16 %v121
    %v1513 = vunpack.c.h.b16 %v121
    %v1514 = vunpack.c.l.b16 %v122
    %v1515 = vunpack.c.h.b16 %v122
    %v1516 = vunpack.c.l.b16 %v123
    %v1517 = vunpack.c.h.b16 %v123
    %v1518 = vunpack.c.l.b16 %v124
    %v1519 = vunpack.c.h.b16 %v124
    %v1520 = vunpack.c.l.b16 %v125
    %v1521 = vunpack.c.h.b16 %v125
    %v1522 = vunpack.c.l.b16 %v126
    %v1523 = vunpack.c.h.b16 %v126
    %v1524 = vunpack.c.l.b16 %v127
    %v1525 = vunpack.c.h.b16 %v127
    %v1526 = vunpack.c.l.b16 %v128
    %v1527 = vunpack.c.h.b16 %v128
    %v1528 = vunpack.c.l.b16 %v129
    %v1529 = vunpack.c.h.b16 %v129
    %v1530 = vunpack.c.l.b16 %v130
    %v1531 = vunpack.c.h.b16 %v130
    %v1532 = vunpack.c.l.b16 %v131
    %v1533 = vunpack.c.h.b16 %v131
    %v1534 = vunpack.c.l.b16 %v132
    %v1535 = vunpack.c.h.b16 %v132
    %v1536 = vunpack.c.l.b16 %v133
    %v1537 = vunpack.c.h.b16 %v133
    %v1538 = vunpack.c.l.b16 %v134
    %v1539 = vunpack.c.h.b16 %v134
    %v1540 = vunpack.c.l.b16 %v135
    %v1541 = vunpack.c.h.b16 %v135
    %v1542 = vunpack.c.l.b16 %v136
    %v1543 = vunpack.c.h.b16 %v136
    %v1544 = vunpack.c.l.b16 %v137
    %v1545 = vunpack.c.h.b16 %v137
    %v1546 = vunpack.c.l.b16 %v138
    %v1547 = vunpack.c.h.b16 %v138
    %v1548 = vunpack.c.l.b16 %v139
    %v1549 = vunpack.c.h.b16 %v139
    %v1550 = vunpack.c.l.b16 %v140
    %v1551 = vunpack.c.h.b16 %v140
    %v1552 = vunpack.c.l.b16 %v141
    %v1553 = vunpack.c.h.b16 %v141
    %v1554 = vunpack.c.l.b16 %v142
    %v1555 = vunpack.c.h.b16 %v142
    %v1556 = vunpack.c.l.b16 %v143
    %v1557 = vunpack.c.h.b16 %v143
    %v1558 = vunpack.c.l.b16 %v144
    %v1559 = vunpack.c.h.b16 %v144
    %v1560 = vunpack.c.l.b16 %v145
    %v1561 = vunpack.c.h.b16 %v145
    %v1562 = vunpack.c.l.b16 %v146
    %v1563 = vunpack.c.h.b16 %v146
    %v1564 = vunpack.c.l.b16 %v147
    %v1565 = vunpack.c.h.b16 %v147
    %v1566 = vunpack.c.l.b16 %v148
    %v1567 = vunpack.c.h.b16 %v148
    %v1568 = vunpack.c.l.b16 %v149
    %v1569 = vunpack.c.h.b16 %v149
    %v1570 = vunpack.c.l.b16 %v150
    %v1571 = vunpack.c.h.b16 %v150
    %v1572 = vunpack.c.l.b16 %v151
    %v1573 = vunpack.c.h.b16 %v151
    %v1574 = vunpack.c.l.b16 %v152
    %v1575 = vunpack.c.h.b16 %v152
    %v1576 = vunpack.c.l.b16 %v153
    %v1577 = vunpack.c.h.b16 %v153
    %v1578 = vunpack.c.l.b16 %v154
    %v1579 = vunpack.c.h.b16 %v154
    %v1580 = vunpack.c.l.b16 %v155
    %v1581 = vunpack.c.h.b16 %v155
    %v1582 = vunpack.c.l.b16 %v156
    %v1583 = vunpack.c.h.b16 %v156
    %v1584 = vunpack.c.l.b16 %v157
    %v1585 = vunpack.c.h.b16 %v157
    %v1586 = vunpack.c.l.b16 %v158
    %v1587 = vunpack.c.h.b16 %v158
    %v1588 = vunpack.c.l.b16 %v159
    %v1589 = vunpack.c.h.b16 %v159
    %v1590 = vunpack.c.l.b16 %v160
    %v1591 = vunpack.c.h.b16 %v160
    %v1592 = vunpack.c.l.b16 %v161
    %v1593 = vunpack.c.h.b16 %v161
    %v1594 = vunpack.c.l.b16 %v162
    %v1595 = vunpack.c.h.b16 %v162
    %v1596 = vpack.c.b16 %v1342, %v1340
    %v1597 = vpack.c.b16 %v1343, %v1341
    %v1598 = vpack.c.b16 %v1346, %v1344
    %v1599 = vpack.c.b16 %v1347, %v1345
    %v1600 = vpack.c.b16 %v1350, %v1348
    %v1601 = vpack.c.b16 %v1351, %v1349
    %v1602 = vpack.c.b16 %v1354, %v1352
    %v1603 = vpack.c.b16 %v1355, %v1353
    %v1604 = vpack.c.b16 %v1358, %v1356
    %v1605 = vpack.c.b16 %v1359, %v1357
    %v1606 = vpack.c.b16 %v1362, %v1360
    %v1607 = vpack.c.b16 %v1363, %v1361
    %v1608 = vpack.c.b16 %v1366, %v1364
    %v1609 = vpack.c.b16 %v1367, %v1365
    %v1610 = vpack.c.b16 %v1370, %v1368
    %v1611 = vpack.c.b16 %v1371, %v1369
    %v1612 = vpack.c.b16 %v1374, %v1372
    %v1613 = vpack.c.b16 %v1375, %v1373
    %v1614 = vpack.c.b16 %v1378, %v1376
    %v1615 = vpack.c.b16 %v1379, %v1377
    %v1616 = vpack.c.b16 %v1382, %v1380
    %v1617 = vpack.c.b16 %v1383, %v1381
    %v1618 = vpack.c.b16 %v1386, %v1384
    %v1619 = vpack.c.b16 %v1387, %v1385
    %v1620 = vpack.c.b16 %v1390, %v1388
    %v1621 = vpack.c.b16 %v1391, %v1389
    %v1622 = vpack.c.b16 %v1394, %v1392
    %v1623 = vpack.c.b16 %v1395, %v1393
    %v1624 = vpack.c.b16 %v1398, %v1396
    %v1625 = vpack.c.b16 %v1399, %v1397
    %v1626 = vpack.c.b16 %v1402, %v1400
    %v1627 = vpack.c.b16 %v1403, %v1401
    %v1628 = vpack.c.b16 %v1406, %v1404
    %v1629 = vpack.c.b16 %v1407, %v1405
    %v1630 = vpack.c.b16 %v1410, %v1408
    %v1631 = vpack.c.b16 %v1411, %v1409
    %v1632 = vpack.c.b16 %v1414, %v1412
    %v1633 = vpack.c.b16 %v1415, %v1413
    %v1634 = vpack.c.b16 %v1418, %v1416
    %v1635 = vpack.c.b16 %v1419, %v1417
    %v1636 = vpack.c.b16 %v1422, %v1420
    %v1637 = vpack.c.b16 %v1423, %v1421
    %v1638 = vpack.c.b16 %v1426, %v1424
    %v1639 = vpack.c.b16 %v1427, %v1425
    %v1640 = vpack.c.b16 %v1430, %v1428
    %v1641 = vpack.c.b16 %v1431, %v1429
    %v1642 = vpack.c.b16 %v1434, %v1432
    %v1643 = vpack.c.b16 %v1435, %v1433
    %v1644 = vpack.c.b16 %v1438, %v1436
    %v1645 = vpack.c.b16 %v1439, %v1437
    %v1646 = vpack.c.b16 %v1442, %v1440
    %v1647 = vpack.c.b16 %v1443, %v1441
    %v1648 = vpack.c.b16 %v1446, %v1444
    %v1649 = vpack.c.b16 %v1447, %v1445
    %v1650 = vpack.c.b16 %v1450, %v1448
    %v1651 = vpack.c.b16 %v1451, %v1449
    %v1652 = vpack.c.b16 %v1454, %v1452
    %v1653 = vpack.c.b16 %v1455, %v1453
    %v1654 = vpack.c.b16 %v1458, %v1456
    %v1655 = vpack.c.b16 %v1459, %v1457
    %v1656 = vpack.c.b16 %v1462, %v1460
    %v1657 = vpack.c.b16 %v1463, %v1461
    %v1658 = vpack.c.b16 %v1466, %v1464
    %v1659 = vpack.c.b16 %v1467, %v1465
    %v1660 = vpack.c.b16 %v1470, %v1468
    %v1661 = vpack.c.b16 %v1471, %v1469
    %v1662 = vpack.c.b16 %v1474, %v1472
    %v1663 = vpack.c.b16 %v1475, %v1473
    %v1664 = vpack.c.b16 %v1478, %v1476
    %v1665 = vpack.c.b16 %v1479, %v1477
    %v1666 = vpack.c.b16 %v1482, %v1480
    %v1667 = vpack.c.b16 %v1483, %v1481
    %v1668 = vpack.c.b16 %v1486, %v1484
    %v1669 = vpack.c.b16 %v1487, %v1485
    %v1670 = vpack.c.b16 %v1490, %v1488
    %v1671 = vpack.c.b16 %v1491, %v1489
    %v1672 = vpack.c.b16 %v1494, %v1492
    %v1673 = vpack.c.b16 %v1495, %v1493
    %v1674 = vpack.c.b16 %v1498, %v1496
    %v1675 = vpack.c.b16 %v1499, %v1497
    %v1676 = vpack.c.b16 %v1502, %v1500
    %v1677 = vpack.c.b16 %v1503, %v1501
    %v1678 = vpack.c.b16 %v1506, %v1504
    %v1679 = vpack.c.b16 %v1507, %v1505
    %v1680 = vpack.c.b16 %v1510, %v1508
    %v1681 = vpack.c.b16 %v1511, %v1509
    %v1682 = vpack.c.b16 %v1514, %v1512
    %v1683 = vpack.c.b16 %v1515, %v1513
    %v1684 = vpack.c.b16 %v1518, %v1516
    %v1685 = vpack.c.b16 %v1519, %v1517
    %v1686 = vpack.c.b16 %v1522, %v1520
    %v1687 = vpack.c.b16 %v1523, %v1521
    %v1688 = vpack.c.b16 %v1526, %v1524
    %v1689 = vpack.c.b16 %v1527, %v1525
    %v1690 = vpack.c.b16 %v1530, %v1528
    %v1691 = vpack.c.b16 %v1531, %v1529
    %v1692 = vpack.c.b16 %v1534, %v1532
    %v1693 = vpack.c.b16 %v1535, %v1533
    %v1694 = vpack.c.b16 %v1538, %v1536
    %v1695 = vpack.c.b16 %v1539, %v1537
    %v1696 = vpack.c.b16 %v1542, %v1540
    %v1697 = vpack.c.b16 %v1543, %v1541
    %v1698 = vpack.c.b16 %v1546, %v1544
    %v1699 = vpack.c.b16 %v1547, %v1545
    %v1700 = vpack.c.b16 %v1550, %v1548
    %v1701 = vpack.c.b16 %v1551, %v1549
    %v1702 = vpack.c.b16 %v1554, %v1552
    %v1703 = vpack.c.b16 %v1555, %v1553
    %v1704 = vpack.c.b16 %v1558, %v1556
    %v1705 = vpack.c.b16 %v1559, %v1557
    %v1706 = vpack.c.b16 %v1562, %v1560
    %v1707 = vpack.c.b16 %v1563, %v1561
    %v1708 = vpack.c.b16 %v1566, %v1564
    %v1709 = vpack.c.b16 %v1567, %v1565
    %v1710 = vpack.c.b16 %v1570, %v1568
    %v1711 = vpack.c.b16 %v1571, %v1569
    %v1712 = vpack.c.b16 %v1574, %v1572
    %v1713 = vpack.c.b16 %v1575, %v1573
    %v1714 = vpack.c.b16 %v1578, %v1576
    %v1715 = vpack.c.b16 %v1579, %v1577
    %v1716 = vpack.c.b16 %v1582, %v1580
    %v1717 = vpack.c.b16 %v1583, %v1581
    %v1718 = vpack.c.b16 %v1586, %v1584
    %v1719 = vpack.c.b16 %v1587, %v1585
    %v1720 = vpack.c.b16 %v1590, %v1588
    %v1721 = vpack.c.b16 %v1591, %v1589
    %v1722 = vpack.c.b16 %v1594, %v1592
    %v1723 = vpack.c.b16 %v1595, %v1593
    %1852 = vmatprep.subr.bf16.mxu0 %v1597
    %1853 = vmatpush1.bf16.msra.mxu0 %v1596
    %1854 = vmatprep.subr.bf16.mxu0 %v1599
    %1855 = vmatpush1.bf16.msra.mxu0 %v1598
    %1856 = vmatprep.subr.bf16.mxu0 %v1601
    %1857 = vmatpush1.bf16.msra.mxu0 %v1600
    %1858 = vmatprep.subr.bf16.mxu0 %v1603
    %1859 = vmatpush1.bf16.msra.mxu0 %v1602
    %1860 = vmatprep.subr.bf16.mxu0 %v1605
    %1861 = vmatpush1.bf16.msra.mxu0 %v1604
    %1862 = vmatprep.subr.bf16.mxu0 %v1607
    %1863 = vmatpush1.bf16.msra.mxu0 %v1606
    %1864 = vmatprep.subr.bf16.mxu0 %v1609
    %1865 = vmatpush1.bf16.msra.mxu0 %v1608
    %1866 = vmatprep.subr.bf16.mxu0 %v1611
    %1867 = vmatpush1.bf16.msra.mxu0 %v1610
    %1868 = vmatprep.subr.bf16.mxu0 %v1613
    %1869 = vmatpush1.bf16.msra.mxu0 %v1612
    %1870 = vmatprep.subr.bf16.mxu0 %v1615
    %1871 = vmatpush1.bf16.msra.mxu0 %v1614
    %1872 = vmatprep.subr.bf16.mxu0 %v1617
    %1873 = vmatpush1.bf16.msra.mxu0 %v1616
    %1874 = vmatprep.subr.bf16.mxu0 %v1619
    %1875 = vmatpush1.bf16.msra.mxu0 %v1618
    %1876 = vmatprep.subr.bf16.mxu0 %v1621
    %1877 = vmatpush1.bf16.msra.mxu0 %v1620
    %1878 = vmatprep.subr.bf16.mxu0 %v1623
    %1879 = vmatpush1.bf16.msra.mxu0 %v1622
    %1880 = vmatprep.subr.bf16.mxu0 %v1625
    %1881 = vmatpush1.bf16.msra.mxu0 %v1624
    %1882 = vmatprep.subr.bf16.mxu0 %v1627
    %1883 = vmatpush1.bf16.msra.mxu0 %v1626
    %1884 = vmatprep.mubr.bf16.mxu0 %v1192
    %1885 = vmatmul.mubr.bf16.gmra.mrb[0].mxu0 %v1178
    %v1886 = vpop.f32.mrb[0].mxu0
    %v1887 = vadd.f32 %v1148, %v1886
    %v1888 = vpop.f32.mrb[0].mxu0
    %v1889 = vadd.f32 %v1150, %v1888
    %v1890 = vpop.f32.mrb[0].mxu0
    %v1891 = vpop.f32.mrb[0].mxu0
    %1892 = vdwg.mxu0
    %1893 = vmatprep.subr.bf16.mxu0 %v1629
    %1894 = vmatpush1.bf16.msra.mxu0 %v1628
    %1895 = vmatprep.subr.bf16.mxu0 %v1631
    %1896 = vmatpush1.bf16.msra.mxu0 %v1630
    %1897 = vmatprep.subr.bf16.mxu0 %v1633
    %1898 = vmatpush1.bf16.msra.mxu0 %v1632
    %1899 = vmatprep.subr.bf16.mxu0 %v1635
    %1900 = vmatpush1.bf16.msra.mxu0 %v1634
    %1901 = vmatprep.subr.bf16.mxu0 %v1637
    %1902 = vmatpush1.bf16.msra.mxu0 %v1636
    %1903 = vmatprep.subr.bf16.mxu0 %v1639
    %1904 = vmatpush1.bf16.msra.mxu0 %v1638
    %1905 = vmatprep.subr.bf16.mxu0 %v1641
    %1906 = vmatpush1.bf16.msra.mxu0 %v1640
    %1907 = vmatprep.subr.bf16.mxu0 %v1643
    %1908 = vmatpush1.bf16.msra.mxu0 %v1642
    %1909 = vmatprep.subr.bf16.mxu0 %v1645
    %1910 = vmatpush1.bf16.msra.mxu0 %v1644
    %1911 = vmatprep.subr.bf16.mxu0 %v1647
    %1912 = vmatpush1.bf16.msra.mxu0 %v1646
    %1913 = vmatprep.subr.bf16.mxu0 %v1649
    %1914 = vmatpush1.bf16.msra.mxu0 %v1648
    %1915 = vmatprep.subr.bf16.mxu0 %v1651
    %1916 = vmatpush1.bf16.msra.mxu0 %v1650
    %1917 = vmatprep.subr.bf16.mxu0 %v1653
    %1918 = vmatpush1.bf16.msra.mxu0 %v1652
    %1919 = vmatprep.subr.bf16.mxu0 %v1655
    %1920 = vmatpush1.bf16.msra.mxu0 %v1654
    %1921 = vmatprep.subr.bf16.mxu0 %v1657
    %1922 = vmatpush1.bf16.msra.mxu0 %v1656
    %1923 = vmatprep.subr.bf16.mxu0 %v1659
    %1924 = vmatpush1.bf16.msra.mxu0 %v1658
    %1925 = vmatprep.mubr.bf16.mxu0 %v1202
    %1926 = vmatmul.mubr.bf16.gmra.mrb[0].mxu0 %v1200
    %v1927 = vpop.f32.mrb[0].mxu0
    %v1928 = vadd.f32 %v1887, %v1927
    %v1929 = vpop.f32.mrb[0].mxu0
    %v1930 = vadd.f32 %v1889, %v1929
    %v1931 = vpop.f32.mrb[0].mxu0
    %v1932 = vpop.f32.mrb[0].mxu0
    %1933 = vdwg.mxu0
    %1934 = vmatprep.subr.bf16.mxu0 %v1661
    %1935 = vmatpush1.bf16.msra.mxu0 %v1660
    %1936 = vmatprep.subr.bf16.mxu0 %v1663
    %1937 = vmatpush1.bf16.msra.mxu0 %v1662
    %1938 = vmatprep.subr.bf16.mxu0 %v1665
    %1939 = vmatpush1.bf16.msra.mxu0 %v1664
    %1940 = vmatprep.subr.bf16.mxu0 %v1667
    %1941 = vmatpush1.bf16.msra.mxu0 %v1666
    %1942 = vmatprep.subr.bf16.mxu0 %v1669
    %1943 = vmatpush1.bf16.msra.mxu0 %v1668
    %1944 = vmatprep.subr.bf16.mxu0 %v1671
    %1945 = vmatpush1.bf16.msra.mxu0 %v1670
    %1946 = vmatprep.subr.bf16.mxu0 %v1673
    %1947 = vmatpush1.bf16.msra.mxu0 %v1672
    %1948 = vmatprep.subr.bf16.mxu0 %v1675
    %1949 = vmatpush1.bf16.msra.mxu0 %v1674
    %1950 = vmatprep.subr.bf16.mxu0 %v1677
    %1951 = vmatpush1.bf16.msra.mxu0 %v1676
    %1952 = vmatprep.subr.bf16.mxu0 %v1679
    %1953 = vmatpush1.bf16.msra.mxu0 %v1678
    %1954 = vmatprep.subr.bf16.mxu0 %v1681
    %1955 = vmatpush1.bf16.msra.mxu0 %v1680
    %1956 = vmatprep.subr.bf16.mxu0 %v1683
    %1957 = vmatpush1.bf16.msra.mxu0 %v1682
    %1958 = vmatprep.subr.bf16.mxu0 %v1685
    %1959 = vmatpush1.bf16.msra.mxu0 %v1684
    %1960 = vmatprep.subr.bf16.mxu0 %v1687
    %1961 = vmatpush1.bf16.msra.mxu0 %v1686
    %1962 = vmatprep.subr.bf16.mxu0 %v1689
    %1963 = vmatpush1.bf16.msra.mxu0 %v1688
    %1964 = vmatprep.subr.bf16.mxu0 %v1691
    %1965 = vmatpush1.bf16.msra.mxu0 %v1690
    %1966 = vmatprep.mubr.bf16.mxu0 %v1199
    %1967 = vmatmul.mubr.bf16.gmra.mrb[0].mxu0 %v1185
    %v1968 = vpop.f32.mrb[0].mxu0
    %v1969 = vadd.f32 %v1928, %v1968
    %v1970 = vpop.f32.mrb[0].mxu0
    %v1971 = vadd.f32 %v1930, %v1970
    %v1972 = vpop.f32.mrb[0].mxu0
    %v1973 = vpop.f32.mrb[0].mxu0
    %1974 = vdwg.mxu0
    %1975 = vmatprep.subr.bf16.mxu0 %v1693
    %1976 = vmatpush1.bf16.msra.mxu0 %v1692
    %1977 = vmatprep.subr.bf16.mxu0 %v1695
    %1978 = vmatpush1.bf16.msra.mxu0 %v1694
    %1979 = vmatprep.subr.bf16.mxu0 %v1697
    %1980 = vmatpush1.bf16.msra.mxu0 %v1696
    %1981 = vmatprep.subr.bf16.mxu0 %v1699
    %1982 = vmatpush1.bf16.msra.mxu0 %v1698
    %1983 = vmatprep.subr.bf16.mxu0 %v1701
    %1984 = vmatpush1.bf16.msra.mxu0 %v1700
    %1985 = vmatprep.subr.bf16.mxu0 %v1703
    %1986 = vmatpush1.bf16.msra.mxu0 %v1702
    %1987 = vmatprep.subr.bf16.mxu0 %v1705
    %1988 = vmatpush1.bf16.msra.mxu0 %v1704
    %1989 = vmatprep.subr.bf16.mxu0 %v1707
    %1990 = vmatpush1.bf16.msra.mxu0 %v1706
    %1991 = vmatprep.subr.bf16.mxu0 %v1709
    %1992 = vmatpush1.bf16.msra.mxu0 %v1708
    %1993 = vmatprep.subr.bf16.mxu0 %v1711
    %1994 = vmatpush1.bf16.msra.mxu0 %v1710
    %1995 = vmatprep.subr.bf16.mxu0 %v1713
    %1996 = vmatpush1.bf16.msra.mxu0 %v1712
    %1997 = vmatprep.subr.bf16.mxu0 %v1715
    %1998 = vmatpush1.bf16.msra.mxu0 %v1714
    %1999 = vmatprep.subr.bf16.mxu0 %v1717
    %2000 = vmatpush1.bf16.msra.mxu0 %v1716
    %2001 = vmatprep.subr.bf16.mxu0 %v1719
    %2002 = vmatpush1.bf16.msra.mxu0 %v1718
    %2003 = vmatprep.subr.bf16.mxu0 %v1721
    %2004 = vmatpush1.bf16.msra.mxu0 %v1720
    %2005 = vmatprep.subr.bf16.mxu0 %v1723
    %2006 = vmatpush1.bf16.msra.mxu0 %v1722
    %2007 = vmatprep.mubr.bf16.mxu0 %v1203
    %2008 = vmatmul.mubr.bf16.gmra.mrb[0].mxu0 %v1201
    %v2009 = vpop.f32.mrb[0].mxu0
    %v2010 = vadd.f32 %v1969, %v2009
    %v2011 = vpop.f32.mrb[0].mxu0
    %v2012 = vadd.f32 %v1971, %v2011
    %v2013 = vpop.f32.mrb[0].mxu0
    %v2014 = vpop.f32.mrb[0].mxu0
    %2015 = vdwg.mxu0
    %v2016 = vld [vmem:[%s2] sm:$0x3]
    %v2017 = vld [vmem:[%s5] sm:$0xff]
    %v2018 = vld [vmem:[%s5 + $0x8] sm:$0xff]
    %v2019 = vld [vmem:[%s5 + $0x10] sm:$0xff]
    %v2020 = vld [vmem:[%s5 + $0x18] sm:$0xff]
    %v2021 = vld [vmem:[%s5 + $0x20] sm:$0xff]
    %v2022 = vld [vmem:[%s5 + $0x28] sm:$0xff]
    %vm2023 = vcmask 195584
    %v2025 = vsel %vm2023, %v2016, 0
    %2027 = vmatprep.subr.mxu0 %v2018
    %2028 = vmatpush1.msra.mxu0 %v2017
    %2029 = vmatprep.subr.mxu0 %v2020
    %2030 = vmatpush1.msra.mxu0 %v2019
    %2031 = vmatprep.subr.mxu0 %v2022
    %2032 = vmatpush1.msra.mxu0 %v2021
    %2033 = vmatprep.subr.mxu0 0.0
    %2034 = vmatpush1.msra.mxu0 0.0
    %2035 = vmatprep.subr.mxu0 0.0
    %2036 = vmatpush1.msra.mxu0 0.0
    %2037 = vmatprep.subr.mxu0 0.0
    %2038 = vmatpush1.msra.mxu0 0.0
    %2039 = vmatprep.subr.mxu0 0.0
    %2040 = vmatpush1.msra.mxu0 0.0
    %2041 = vmatprep.subr.mxu0 0.0
    %2042 = vmatpush1.msra.mxu0 0.0
    %2043 = vmatprep.subr.mxu0 0.0
    %2044 = vmatpush1.msra.mxu0 0.0
    %2045 = vmatprep.subr.mxu0 0.0
    %2046 = vmatpush1.msra.mxu0 0.0
    %2047 = vmatprep.subr.mxu0 0.0
    %2048 = vmatpush1.msra.mxu0 0.0
    %2049 = vmatprep.subr.mxu0 0.0
    %2050 = vmatpush1.msra.mxu0 0.0
    %2051 = vmatprep.subr.mxu0 0.0
    %2052 = vmatpush1.msra.mxu0 0.0
    %2053 = vmatprep.subr.mxu0 0.0
    %2054 = vmatpush1.msra.mxu0 0.0
    %2055 = vmatprep.subr.mxu0 0.0
    %2056 = vmatpush1.msra.mxu0 0.0
    %2057 = vmatprep.subr.mxu0 0.0
    %2058 = vmatpush1.msra.mxu0 0.0
    %2059 = vmatprep.subr.mxu0 0.0
    %2060 = vmatpush1.msra.mxu0 0.0
    %2061 = vmatprep.subr.mxu0 0.0
    %2062 = vmatpush1.msra.mxu0 0.0
    %2063 = vmatprep.subr.mxu0 0.0
    %2064 = vmatpush1.msra.mxu0 0.0
    %2065 = vmatprep.subr.mxu0 0.0
    %2066 = vmatpush1.msra.mxu0 0.0
    %2067 = vmatprep.subr.mxu0 0.0
    %2068 = vmatpush1.msra.mxu0 0.0
    %2069 = vmatprep.subr.mxu0 0.0
    %2070 = vmatpush1.msra.mxu0 0.0
    %2071 = vmatprep.subr.mxu0 0.0
    %2072 = vmatpush1.msra.mxu0 0.0
    %2073 = vmatprep.subr.mxu0 0.0
    %2074 = vmatpush1.msra.mxu0 0.0
    %2075 = vmatprep.subr.mxu0 0.0
    %2076 = vmatpush1.msra.mxu0 0.0
    %2077 = vmatprep.subr.mxu0 0.0
    %2078 = vmatpush1.msra.mxu0 0.0
    %2079 = vmatprep.subr.mxu0 0.0
    %2080 = vmatpush1.msra.mxu0 0.0
    %2081 = vmatprep.subr.mxu0 0.0
    %2082 = vmatpush1.msra.mxu0 0.0
    %2083 = vmatprep.subr.mxu0 0.0
    %2084 = vmatpush1.msra.mxu0 0.0
    %2085 = vmatprep.subr.mxu0 0.0
    %2086 = vmatpush1.msra.mxu0 0.0
    %2087 = vmatprep.subr.mxu0 0.0
    %2088 = vmatpush1.msra.mxu0 0.0
    %2089 = vmatprep.subr.mxu0 0.0
    %2090 = vmatpush1.msra.mxu0 0.0
    %2091 = vmatprep.mubr.f32.mxu0 0.0
    %2092 = vmatmul.mubr.f32.gmra.mrb[0].mxu0 %v2025
    %v2093 = vpop.f32.mrb[0].mxu0
    %v2094 = vadd.f32 0.0, %v2093
    %v2095 = vpop.f32.mrb[0].mxu0
    %v2096 = vadd.f32 0.0, %v2095
    %2097 = vdwg.mxu0
    %v2098 = vadd.f32 %v2010, %v2094
    %v2099 = vadd.f32 %v2012, %v2096
    %v2100 = vld [vmem:[%s6] sm:$0x3]
    %v2102 = vlaneseq
    %v2103 = vshrl.u32 %v2102, 7
    %v2104 = vsub.s32 0, %v2103
    %v2105 = vrot.slane %v2100, %v2104
    %v2106 = vlaneseq
    %v2107 = vshrl.u32 %v2106, 7
    %v2108 = vsub.s32 1, %v2107
    %v2109 = vrot.slane %v2100, %v2108
    %v2112 = vadd.f32 %v2098, %v2105
    %v2113 = vadd.f32 %v2099, %v2109
    %v2114 = vmax.f32 %v2112, 0.0
    %v2115 = vmax.f32 %v2113, 0.0
    %v2116 = vpack.c.bf16 %v2114, %v2114
    %v2117 = vpack.c.bf16 %v2115, %v2115
    %v2118 = vld [vmem:[%s7] sm:$0xf]
    %v2119 = vld [vmem:[%s7 + $0x4] sm:$0xf]
    %v2120 = vld [vmem:[%s7 + $0x8] sm:$0xf]
    %v2121 = vld [vmem:[%s7 + $0xc] sm:$0xf]
    %v2122 = vld [vmem:[%s7 + $0x10] sm:$0xf]
    %v2123 = vld [vmem:[%s7 + $0x14] sm:$0xf]
    %v2124 = vld [vmem:[%s7 + $0x18] sm:$0xf]
    %v2125 = vld [vmem:[%s7 + $0x1c] sm:$0xf]
    %v2126 = vld [vmem:[%s7 + $0x20] sm:$0xf]
    %v2127 = vld [vmem:[%s7 + $0x24] sm:$0xf]
    %v2128 = vld [vmem:[%s7 + $0x28] sm:$0xf]
    %v2129 = vld [vmem:[%s7 + $0x2c] sm:$0xf]
    %v2130 = vld [vmem:[%s7 + $0x30] sm:$0xf]
    %v2131 = vld [vmem:[%s7 + $0x34] sm:$0xf]
    %v2132 = vld [vmem:[%s7 + $0x38] sm:$0xf]
    %v2133 = vld [vmem:[%s7 + $0x3c] sm:$0xf]
    %v2134 = vld [vmem:[%s7 + $0x40] sm:$0xf]
    %v2135 = vld [vmem:[%s7 + $0x44] sm:$0xf]
    %v2136 = vld [vmem:[%s7 + $0x48] sm:$0xf]
    %v2137 = vld [vmem:[%s7 + $0x4c] sm:$0xf]
    %v2138 = vld [vmem:[%s7 + $0x50] sm:$0xf]
    %v2139 = vld [vmem:[%s7 + $0x54] sm:$0xf]
    %v2140 = vld [vmem:[%s7 + $0x58] sm:$0xf]
    %v2141 = vld [vmem:[%s7 + $0x5c] sm:$0xf]
    %v2142 = vld [vmem:[%s7 + $0x60] sm:$0xf]
    %v2143 = vld [vmem:[%s7 + $0x64] sm:$0xf]
    %v2144 = vld [vmem:[%s7 + $0x68] sm:$0xf]
    %v2145 = vld [vmem:[%s7 + $0x6c] sm:$0xf]
    %v2146 = vld [vmem:[%s7 + $0x70] sm:$0xf]
    %v2147 = vld [vmem:[%s7 + $0x74] sm:$0xf]
    %v2148 = vld [vmem:[%s7 + $0x78] sm:$0xf]
    %v2149 = vld [vmem:[%s7 + $0x7c] sm:$0xf]
    %v2150 = vld [vmem:[%s8] sm:$0x1]
    %v2152 = vlaneseq
    %v2153 = vshrl.u32 %v2152, 7
    %v2154 = vsub.s32 0, %v2153
    %v2155 = vrot.slane %v2150, %v2154
    %v2189 = vunpack.c.l.b16 %v2118
    %v2190 = vunpack.c.l.b16 %v2119
    %v2191 = vunpack.c.l.b16 %v2120
    %v2192 = vunpack.c.l.b16 %v2121
    %v2193 = vunpack.c.l.b16 %v2122
    %v2194 = vunpack.c.l.b16 %v2123
    %v2195 = vunpack.c.l.b16 %v2124
    %v2196 = vunpack.c.l.b16 %v2125
    %v2197 = vunpack.c.l.b16 %v2126
    %v2198 = vunpack.c.l.b16 %v2127
    %v2199 = vunpack.c.l.b16 %v2128
    %v2200 = vunpack.c.l.b16 %v2129
    %v2201 = vunpack.c.l.b16 %v2130
    %v2202 = vunpack.c.l.b16 %v2131
    %v2203 = vunpack.c.l.b16 %v2132
    %v2204 = vunpack.c.l.b16 %v2133
    %v2205 = vunpack.c.l.b16 %v2134
    %v2206 = vunpack.c.l.b16 %v2135
    %v2207 = vunpack.c.l.b16 %v2136
    %v2208 = vunpack.c.l.b16 %v2137
    %v2209 = vunpack.c.l.b16 %v2138
    %v2210 = vunpack.c.l.b16 %v2139
    %v2211 = vunpack.c.l.b16 %v2140
    %v2212 = vunpack.c.l.b16 %v2141
    %v2213 = vunpack.c.l.b16 %v2142
    %v2214 = vunpack.c.l.b16 %v2143
    %v2215 = vunpack.c.l.b16 %v2144
    %v2216 = vunpack.c.l.b16 %v2145
    %v2217 = vunpack.c.l.b16 %v2146
    %v2218 = vunpack.c.l.b16 %v2147
    %v2219 = vunpack.c.l.b16 %v2148
    %v2220 = vunpack.c.l.b16 %v2149
    %v2221 = vpack.c.b16 %v2190, %v2189
    %v2222 = vpack.c.b16 %v2192, %v2191
    %v2223 = vpack.c.b16 %v2194, %v2193
    %v2224 = vpack.c.b16 %v2196, %v2195
    %v2225 = vpack.c.b16 %v2198, %v2197
    %v2226 = vpack.c.b16 %v2200, %v2199
    %v2227 = vpack.c.b16 %v2202, %v2201
    %v2228 = vpack.c.b16 %v2204, %v2203
    %v2229 = vpack.c.b16 %v2206, %v2205
    %v2230 = vpack.c.b16 %v2208, %v2207
    %v2231 = vpack.c.b16 %v2210, %v2209
    %v2232 = vpack.c.b16 %v2212, %v2211
    %v2233 = vpack.c.b16 %v2214, %v2213
    %v2234 = vpack.c.b16 %v2216, %v2215
    %v2235 = vpack.c.b16 %v2218, %v2217
    %v2236 = vpack.c.b16 %v2220, %v2219
    %2253 = vmatprep.subr.bf16.mxu0 0
    %2254 = vmatpush1.bf16.msra.mxu0 %v2221
    %2255 = vmatprep.subr.bf16.mxu0 0
    %2256 = vmatpush1.bf16.msra.mxu0 %v2222
    %2257 = vmatprep.subr.bf16.mxu0 0
    %2258 = vmatpush1.bf16.msra.mxu0 %v2223
    %2259 = vmatprep.subr.bf16.mxu0 0
    %2260 = vmatpush1.bf16.msra.mxu0 %v2224
    %2261 = vmatprep.subr.bf16.mxu0 0
    %2262 = vmatpush1.bf16.msra.mxu0 %v2225
    %2263 = vmatprep.subr.bf16.mxu0 0
    %2264 = vmatpush1.bf16.msra.mxu0 %v2226
    %2265 = vmatprep.subr.bf16.mxu0 0
    %2266 = vmatpush1.bf16.msra.mxu0 %v2227
    %2267 = vmatprep.subr.bf16.mxu0 0
    %2268 = vmatpush1.bf16.msra.mxu0 %v2228
    %2269 = vmatprep.subr.bf16.mxu0 0
    %2270 = vmatpush1.bf16.msra.mxu0 %v2229
    %2271 = vmatprep.subr.bf16.mxu0 0
    %2272 = vmatpush1.bf16.msra.mxu0 %v2230
    %2273 = vmatprep.subr.bf16.mxu0 0
    %2274 = vmatpush1.bf16.msra.mxu0 %v2231
    %2275 = vmatprep.subr.bf16.mxu0 0
    %2276 = vmatpush1.bf16.msra.mxu0 %v2232
    %2277 = vmatprep.subr.bf16.mxu0 0
    %2278 = vmatpush1.bf16.msra.mxu0 %v2233
    %2279 = vmatprep.subr.bf16.mxu0 0
    %2280 = vmatpush1.bf16.msra.mxu0 %v2234
    %2281 = vmatprep.subr.bf16.mxu0 0
    %2282 = vmatpush1.bf16.msra.mxu0 %v2235
    %2283 = vmatprep.subr.bf16.mxu0 0
    %2284 = vmatpush1.bf16.msra.mxu0 %v2236
    %2285 = vmatprep.mubr.bf16.mxu0 %v2117
    %2286 = vmatmul.mubr.bf16.gmra.mrb[0].mxu0 %v2116
    %v2287 = vpop.f32.mrb[0].mxu0
    %v2288 = vadd.f32 %v2155, %v2287
    %v2289 = vpop.f32.mrb[0].mxu0
    %v2290 = vpop.f32.mrb[0].mxu0
    %v2291 = vpop.f32.mrb[0].mxu0
    %2292 = vdwg.mxu0
    %2293 = vst [vmem:[#allocation2] sm:$0x3] %v2288
    // Predicated region
    $region38: #{simclr_forward.1} parent=1 // pred_check
      _
    $region39: #{simclr_forward.1} parent=1 // pred_check_branch
      %2295 = sbr.rel (0) target = $region41
    $region40: #{simclr_forward.1} parent=1 // pred_region
      %s2297 = ssub.s32 32, 32
      %2298 = vsyncadd [#allocation3], %s2297
      %s2300 = sshll.u32 [#allocation2], 4
      %s2301 = int_to_ptr.vmem [resolvable:$true] %s2300
      %2303 = dma.vmem_to_hbm [thread:$0]  %s2301, 32, %s9, [#allocation3]
    $region41: #{simclr_forward.1} parent=1 // pred_fallthru
      _
    // Predicated region
    $region42: #{simclr_forward.1} parent=1 // pred_check
      _
    $region43: #{simclr_forward.1} parent=1 // pred_check_branch
      %2305 = sbr.rel (0) target = $region45
    $region44: #{simclr_forward.1} parent=1 // pred_region
      %2306 = dma.done [#allocation3], 32
    $region45: #{simclr_forward.1} parent=1 // pred_fallthru
      _
    %2307 = vsyncpa [#allocation3], 1

</llo_original>
